<compile_context>
chip_gen: v7x
topology: tpu7x:2x2x1
jax: 0.10.0
libtpu: 0.0.40
codegen_flags: <defaults>
</compile_context>

<pallas_src>
import functools

import jax
import jax.numpy as jnp
from jax import lax
from jax.experimental import pallas as pl
from jax.experimental.pallas import tpu as pltpu

_MIB = 1024 * 1024


def _sdpa_kernel(q_ref, k_ref, v_ref, out_ref, *attn_out, inv_temperature,
                 top_k_plus_1, precision):
    """One (batch-tile, query-tile) block per grid step.

    Block shapes: q (BT, TQ, D), k (BT, Lk, D), v (BT, Lk, Dv),
                  out (BT, TQ, Dv), [attn (BT, TQ, Lk) if requested].
    """
    f32 = jnp.float32

    # scores: (BT, TQ, Lk).  Contract on the last dims (no explicit k
    # transpose); f32 accumulation on the MXU.  Temperature is applied to the
    # f32 scores (same op ordering as the reference, dtype-agnostic).
    scores = lax.dot_general(
        q_ref[...], k_ref[...],
        dimension_numbers=(((2,), (2,)), ((0,), (0,))),
        precision=precision,
        preferred_element_type=f32)
    scores = scores * f32(inv_temperature)

    # softmax over the key axis (dim=2 in the torch code), in f32.
    m = jnp.max(scores, axis=-1, keepdims=True)
    e = jnp.exp(scores - m)                       # un-normalized softmax
    denom = jnp.sum(e, axis=-1, keepdims=True)    # (BT, TQ, 1)

    lk = e.shape[-1]
    eps = f32(1e-7)  # matches the torch code's 10e-8

    if lk > top_k_plus_1:  # static branch: mirrors Sparse_attention
        # (topk+1)-th largest per row via iterative max-masking, done on the
        # UN-normalized exponentials (positive ordering is preserved, so the
        # k-th largest of attn is kth_e/denom).  Saves a full-tile normalize
        # and one live (BT,TQ,Lk) intermediate versus working on attn.
        # NOTE: exact ties at the running max are masked together; for softmax
        # of continuous random inputs this is a measure-zero event.
        def body(_, carry):
            work, kth = carry
            work = jnp.where(work >= kth, f32(-1.0), work)
            return work, jnp.max(work, axis=-1, keepdims=True)

        kth0 = jnp.max(e, axis=-1, keepdims=True)
        _, kth = lax.fori_loop(0, top_k_plus_1 - 1, body, (e, kth0),
                               unroll=True)
        # Reference (on attn = e/denom):
        #   delta = kth/denom + eps ; w = max(attn - delta, 0)
        #   attn  = w / (sum(w) + eps)
        # Multiply through by denom -> identical math on e:
        w = jnp.maximum(e - (kth + eps * denom), f32(0.0))
        total = jnp.sum(w, axis=-1, keepdims=True) + eps * denom
    else:
        # Sparse_attention returns its input unchanged: plain softmax.
        w = e
        total = denom

    # Single EXACT normalization (returned to the caller, so no approx
    # reciprocal): cheap (BT,TQ,1) divide, then one broadcast multiply.
    attn = w * (f32(1.0) / total)

    # out = attn @ v : f32 accumulation on the MXU.
    out = lax.dot_general(
        attn.astype(v_ref.dtype), v_ref[...],
        dimension_numbers=(((2,), (1,)), ((0,), (0,))),
        precision=precision,
        preferred_element_type=f32)

    out_ref[...] = out.astype(out_ref.dtype)
    if attn_out:
        attn_out[0][...] = attn.astype(attn_out[0].dtype)


def _vmem_capacity_bytes():
    """Per-generation VMEM capacity (128 MiB v5e/v6e, 64 MiB v7x)."""
    try:
        info = pltpu.get_tpu_info()
        cap = getattr(info, "vmem_capacity_bytes", None)
        if cap:
            return int(cap)
    except Exception:
        pass
    return 64 * _MIB  # conservative default: smallest (v7x)


def _vmem_estimate(bt, tq, lk, d, dv, in_itemsize, attn_itemsize, write_attn):
    # Double-buffered input/output tiles ...
    io = 2 * in_itemsize * bt * (tq * d + lk * d + lk * dv + tq * dv)
    if write_attn:
        io += 2 * attn_itemsize * bt * tq * lk
    # ... plus concurrently-live f32 intermediates inside the body
    # (scores, e/work, w, attn are each (BT,TQ,Lk); plus q/out f32 temps) ...
    interm = 4 * bt * tq * (4 * lk + d + 2 * dv)
    # ... plus slack for compiler-internal scratch.
    return io + interm + _MIB


def _choose_tiles(b, lq, lk, d, dv, in_itemsize, attn_itemsize, write_attn,
                  budget):
    """Pick (BT, TQ): largest BT*TQ whose blocks obey the (8,128) rule and fit
    the generation-aware VMEM budget (no artificial 256-row cap)."""
    tq_cands = [t for t in range(lq, 0, -1)
                if lq % t == 0 and (t % 8 == 0 or t == lq)]
    if not tq_cands:
        tq_cands = [lq]
    bt_cands = [t for t in range(b, 0, -1) if b % t == 0]

    best = None
    for tq in tq_cands:
        for bt in bt_cands:
            if _vmem_estimate(bt, tq, lk, d, dv, in_itemsize, attn_itemsize,
                              write_attn) <= budget:
                key = (bt * tq, tq)
                if best is None or key > best[0]:
                    best = (key, (bt, tq))
                break  # largest feasible BT for this TQ found
    if best is not None:
        return best[1]
    # Even the smallest tile exceeds the budget (very long Lk).
    # TODO(synk): Lk-tiled two-pass fallback needed for such shapes.
    return 1, tq_cands[-1]


def scaled_dot_product_attention(q, k, v, *, temperature: float, topk: int,
                                 attn_dtype=None, return_attn: bool = True):
    """Pallas forward of ScaledDotProductAttention (flag=False, mask=None,
    grad_sparse=False).  Returns (output, attn_or_None, extra_loss)."""
    B, Lq, D = q.shape
    Bk, Lk, Dk = k.shape
    Bv, Lkv, Dv = v.shape
    assert Dk == D and Bk == B and Bv == B and Lkv == Lk

    # Callers can pass attn_dtype=jnp.bfloat16 to halve the dominant B*Lq*Lk
    # HBM writeback, or return_attn=False to skip it entirely.
    attn_dtype = q.dtype if attn_dtype is None else jnp.dtype(attn_dtype)
    in_itemsize = jnp.dtype(q.dtype).itemsize
    attn_itemsize = jnp.dtype(attn_dtype).itemsize

    cap = _vmem_capacity_bytes()
    budget = (cap * 3) // 4          # ~96 MiB on v5e/v6e, ~48 MiB on v7x
    BT, TQ = _choose_tiles(B, Lq, Lk, D, Dv, in_itemsize, attn_itemsize,
                           return_attn, budget)
    grid = (B // BT, Lq // TQ)

    est = _vmem_estimate(BT, TQ, Lk, D, Dv, in_itemsize, attn_itemsize,
                         return_attn)
    vmem_limit = int(min(cap - 12 * _MIB,
                         max(est + est // 4 + 8 * _MIB, 32 * _MIB)))

    in_specs = [
        pl.BlockSpec((BT, TQ, D), lambda b, i: (b, i, 0)),
        pl.BlockSpec((BT, Lk, D), lambda b, i: (b, 0, 0)),
        pl.BlockSpec((BT, Lk, Dv), lambda b, i: (b, 0, 0)),
    ]
    out_spec = pl.BlockSpec((BT, TQ, Dv), lambda b, i: (b, i, 0))
    attn_spec = pl.BlockSpec((BT, TQ, Lk), lambda b, i: (b, i, 0))
    if return_attn:
        out_shape = (jax.ShapeDtypeStruct((B, Lq, Dv), q.dtype),
                     jax.ShapeDtypeStruct((B, Lq, Lk), attn_dtype))
        out_specs = [out_spec, attn_spec]
    else:
        out_shape = (jax.ShapeDtypeStruct((B, Lq, Dv), q.dtype),)
        out_specs = [out_spec]

    def build(precision):
        kernel = functools.partial(
            _sdpa_kernel,
            inv_temperature=1.0 / float(temperature),
            top_k_plus_1=int(topk) + 1,
            precision=precision)
        return pl.pallas_call(
            kernel,
            out_shape=out_shape,
            grid_spec=pltpu.PrefetchScalarGridSpec(
                num_scalar_prefetch=0,
                grid=grid,
                in_specs=in_specs,
                out_specs=out_specs),
            compiler_params=pltpu.CompilerParams(
                dimension_semantics=("parallel", "parallel"),
                vmem_limit_bytes=vmem_limit),
        )

    # HIGHEST keeps f32 inputs at true-f32 matmul accuracy (kernel == pure-f32
    # reference); fall back to default precision if a backend rejects it.
    try:
        res = build(lax.Precision.HIGHEST)(q, k, v)
    except Exception:
        res = build(None)(q, k, v)

    extra_loss = 0.0
    if return_attn:
        out, attn = res
        return out, attn, extra_loss
    (out,) = res
    return out, None, extra_loss


def _reference(q, k, v, *, temperature: float, topk: int):
    """Pure-JAX reference mirroring the PyTorch module (flag=False)."""
    attn = jnp.einsum("bqd,bkd->bqk", q, k, precision="highest") / temperature
    attn = jax.nn.softmax(attn, axis=2)
    eps = 1e-7
    top_k = topk + 1
    lk = attn.shape[2]
    if lk > top_k:
        flat = attn.reshape(-1, lk)
        delta = jnp.sort(flat, axis=1)[:, lk - top_k] + eps
        w = jnp.maximum(flat - delta[:, None], 0.0)
        flat = w / (jnp.sum(w, axis=1, keepdims=True) + eps)
        attn = flat.reshape(attn.shape)
    out = jnp.einsum("bqk,bkd->bqd", attn, v, precision="highest")
    return out, attn, 0.0


if __name__ == "__main__":
    # Small shapes consistent with the module's bmm semantics.
    B, Lq, Lk, D, Dv = 2, 8, 8, 32, 32
    topk = 3
    temperature = float(D) ** 0.5

    key = jax.random.PRNGKey(0)
    kq, kk, kv = jax.random.split(key, 3)
    q = jax.random.normal(kq, (B, Lq, D), dtype=jnp.float32)
    k = jax.random.normal(kk, (B, Lk, D), dtype=jnp.float32)
    v = jax.random.normal(kv, (B, Lk, Dv), dtype=jnp.float32)

    out, attn, extra_loss = scaled_dot_product_attention(
        q, k, v, temperature=temperature, topk=topk)
    out = jax.block_until_ready(out)
    attn = jax.block_until_ready(attn)

    # sanity check against pure-JAX (true-f32) reference
    out_ref, attn_ref, _ = _reference(q, k, v, temperature=temperature,
                                      topk=topk)
    assert out.shape == (B, Lq, Dv) and attn.shape == (B, Lq, Lk)
    assert jnp.allclose(attn, attn_ref, atol=2e-3, rtol=2e-3), (
        float(jnp.max(jnp.abs(attn - attn_ref))))
    assert jnp.allclose(out, out_ref, atol=2e-3, rtol=2e-3), (
        float(jnp.max(jnp.abs(out - out_ref))))

    # output-only fast path: skips the dominant B*Lq*Lk attn HBM writeback.
    out2, attn_none, _ = scaled_dot_product_attention(
        q, k, v, temperature=temperature, topk=topk, return_attn=False)
    out2 = jax.block_until_ready(out2)
    assert attn_none is None
    assert jnp.allclose(out2, out_ref, atol=2e-3, rtol=2e-3), (
        float(jnp.max(jnp.abs(out2 - out_ref))))

    print("KERNEL_OK")
</pallas_src>

<mosaic_0001>
module attributes {stable_mosaic.version = 11 : i64} {
  func.func @_sdpa_kernel(%arg0: i32, %arg1: i32, %arg2: memref<2x8x32xf32, #tpu.memory_space<vmem>>, %arg3: memref<2x8x32xf32, #tpu.memory_space<vmem>>, %arg4: memref<2x8x32xf32, #tpu.memory_space<vmem>>, %arg5: memref<2x8x32xf32, #tpu.memory_space<vmem>>, %arg6: memref<2x8x8xf32, #tpu.memory_space<vmem>>) attributes {dimension_semantics = [#tpu.dimension_semantics<parallel>, #tpu.dimension_semantics<parallel>], iteration_bounds = array<i64: 1, 1>, scalar_prefetch = 0 : i64, scratch_operands = 0 : i64, tpu.core_type = #tpu.core_type<tc>, window_params = [{transform_indices = @transform_0, window_bounds = array<i64: 2, 8, 32>}, {transform_indices = @transform_1, window_bounds = array<i64: 2, 8, 32>}, {transform_indices = @transform_2, window_bounds = array<i64: 2, 8, 32>}, {transform_indices = @transform_3, window_bounds = array<i64: 2, 8, 32>}, {transform_indices = @transform_4, window_bounds = array<i64: 2, 8, 8>}]} {
    %c0 = arith.constant 0 : index
    %c0_0 = arith.constant 0 : index
    %c0_1 = arith.constant 0 : index
    %0 = vector.load %arg2[%c0, %c0_0, %c0_1] : memref<2x8x32xf32, #tpu.memory_space<vmem>>, vector<2x8x32xf32>
    %c0_2 = arith.constant 0 : index
    %c0_3 = arith.constant 0 : index
    %c0_4 = arith.constant 0 : index
    %1 = vector.load %arg3[%c0_2, %c0_3, %c0_4] : memref<2x8x32xf32, #tpu.memory_space<vmem>>, vector<2x8x32xf32>
    %cst = arith.constant dense<0.000000e+00> : vector<2x8x8xf32>
    %2 = tpu.matmul %0, %1, %cst {dimension_numbers = #tpu.dot_dimension_numbers<[2], [2], [1], [1], [0, 0, 0, 1, 1, 1], [0], [0]>, precision = #tpu.contract_precision<fp32>} : vector<2x8x32xf32>, vector<2x8x32xf32>, vector<2x8x8xf32> -> vector<2x8x8xf32>
    %cst_5 = arith.constant 0.176776692 : f32
    %3 = vector.broadcast %cst_5 : f32 to vector<2x8x8xf32>
    %4 = arith.mulf %2, %3 : vector<2x8x8xf32>
    %cst_6 = arith.constant dense<0xFF800000> : vector<2x8xf32>
    %5 = vector.multi_reduction <maximumf>, %4, %cst_6 [2] : vector<2x8x8xf32> to vector<2x8xf32>
    %6 = vector.shape_cast %5 : vector<2x8xf32> to vector<2x8x1xf32>
    %7 = vector.broadcast %6 : vector<2x8x1xf32> to vector<2x8x8xf32>
    %8 = arith.subf %4, %7 : vector<2x8x8xf32>
    %9 = math.exp %8 : vector<2x8x8xf32>
    %cst_7 = arith.constant dense<0.000000e+00> : vector<2x8xf32>
    %10 = vector.multi_reduction <add>, %9, %cst_7 [2] : vector<2x8x8xf32> to vector<2x8xf32>
    %11 = vector.shape_cast %10 : vector<2x8xf32> to vector<2x8x1xf32>
    %cst_8 = arith.constant dense<0xFF800000> : vector<2x8xf32>
    %12 = vector.multi_reduction <maximumf>, %9, %cst_8 [2] : vector<2x8x8xf32> to vector<2x8xf32>
    %13 = vector.shape_cast %12 : vector<2x8xf32> to vector<2x8x1xf32>
    %c0_i32 = arith.constant 0 : i32
    %14 = vector.broadcast %13 : vector<2x8x1xf32> to vector<2x8x8xf32>
    %15 = arith.cmpf oge, %9, %14 : vector<2x8x8xf32>
    %cst_9 = arith.constant -1.000000e+00 : f32
    %16 = vector.broadcast %cst_9 : f32 to vector<2x8x8xf32>
    %17 = arith.select %15, %16, %9 : vector<2x8x8xi1>, vector<2x8x8xf32>
    %cst_10 = arith.constant dense<0xFF800000> : vector<2x8xf32>
    %18 = vector.multi_reduction <maximumf>, %17, %cst_10 [2] : vector<2x8x8xf32> to vector<2x8xf32>
    %19 = vector.shape_cast %18 : vector<2x8xf32> to vector<2x8x1xf32>
    %c1_i32 = arith.constant 1 : i32
    %20 = vector.broadcast %19 : vector<2x8x1xf32> to vector<2x8x8xf32>
    %21 = arith.cmpf oge, %17, %20 : vector<2x8x8xf32>
    %cst_11 = arith.constant -1.000000e+00 : f32
    %22 = vector.broadcast %cst_11 : f32 to vector<2x8x8xf32>
    %23 = arith.select %21, %22, %17 : vector<2x8x8xi1>, vector<2x8x8xf32>
    %cst_12 = arith.constant dense<0xFF800000> : vector<2x8xf32>
    %24 = vector.multi_reduction <maximumf>, %23, %cst_12 [2] : vector<2x8x8xf32> to vector<2x8xf32>
    %25 = vector.shape_cast %24 : vector<2x8xf32> to vector<2x8x1xf32>
    %c2_i32 = arith.constant 2 : i32
    %26 = vector.broadcast %25 : vector<2x8x1xf32> to vector<2x8x8xf32>
    %27 = arith.cmpf oge, %23, %26 : vector<2x8x8xf32>
    %cst_13 = arith.constant -1.000000e+00 : f32
    %28 = vector.broadcast %cst_13 : f32 to vector<2x8x8xf32>
    %29 = arith.select %27, %28, %23 : vector<2x8x8xi1>, vector<2x8x8xf32>
    %cst_14 = arith.constant dense<0xFF800000> : vector<2x8xf32>
    %30 = vector.multi_reduction <maximumf>, %29, %cst_14 [2] : vector<2x8x8xf32> to vector<2x8xf32>
    %31 = vector.shape_cast %30 : vector<2x8xf32> to vector<2x8x1xf32>
    %cst_15 = arith.constant 1.000000e-07 : f32
    %32 = vector.broadcast %cst_15 : f32 to vector<2x8x1xf32>
    %33 = arith.mulf %32, %11 : vector<2x8x1xf32>
    %34 = arith.addf %31, %33 : vector<2x8x1xf32>
    %35 = vector.broadcast %34 : vector<2x8x1xf32> to vector<2x8x8xf32>
    %36 = arith.subf %9, %35 : vector<2x8x8xf32>
    %cst_16 = arith.constant 0.000000e+00 : f32
    %37 = vector.broadcast %cst_16 : f32 to vector<2x8x8xf32>
    %38 = arith.maximumf %36, %37 : vector<2x8x8xf32>
    %cst_17 = arith.constant dense<0.000000e+00> : vector<2x8xf32>
    %39 = vector.multi_reduction <add>, %38, %cst_17 [2] : vector<2x8x8xf32> to vector<2x8xf32>
    %40 = vector.shape_cast %39 : vector<2x8xf32> to vector<2x8x1xf32>
    %cst_18 = arith.constant 1.000000e-07 : f32
    %41 = vector.broadcast %cst_18 : f32 to vector<2x8x1xf32>
    %42 = arith.mulf %41, %11 : vector<2x8x1xf32>
    %43 = arith.addf %40, %42 : vector<2x8x1xf32>
    %cst_19 = arith.constant 1.000000e+00 : f32
    %44 = vector.broadcast %cst_19 : f32 to vector<2x8x1xf32>
    %45 = arith.divf %44, %43 : vector<2x8x1xf32>
    %46 = vector.broadcast %45 : vector<2x8x1xf32> to vector<2x8x8xf32>
    %47 = arith.mulf %38, %46 : vector<2x8x8xf32>
    %c0_20 = arith.constant 0 : index
    %c0_21 = arith.constant 0 : index
    %c0_22 = arith.constant 0 : index
    %48 = vector.load %arg4[%c0_20, %c0_21, %c0_22] : memref<2x8x32xf32, #tpu.memory_space<vmem>>, vector<2x8x32xf32>
    %cst_23 = arith.constant dense<0.000000e+00> : vector<2x8x32xf32>
    %49 = tpu.matmul %47, %48, %cst_23 {dimension_numbers = #tpu.dot_dimension_numbers<[2], [1], [1], [2], [0, 0, 0, 1, 1, 2], [0], [0]>, precision = #tpu.contract_precision<fp32>} : vector<2x8x8xf32>, vector<2x8x32xf32>, vector<2x8x32xf32> -> vector<2x8x32xf32>
    %c0_24 = arith.constant 0 : index
    %c0_25 = arith.constant 0 : index
    %c0_26 = arith.constant 0 : index
    %50 = vector.load %arg5[%c0_24, %c0_25, %c0_26] : memref<2x8x32xf32, #tpu.memory_space<vmem>>, vector<2x8x32xf32>
    tpu.vector_store %arg5[%c0_24, %c0_25, %c0_26], %49 {strides = array<i32>} : memref<2x8x32xf32, #tpu.memory_space<vmem>>, vector<2x8x32xf32>,
    %c0_27 = arith.constant 0 : index
    %c0_28 = arith.constant 0 : index
    %c0_29 = arith.constant 0 : index
    %51 = vector.load %arg6[%c0_27, %c0_28, %c0_29] : memref<2x8x8xf32, #tpu.memory_space<vmem>>, vector<2x8x8xf32>
    tpu.vector_store %arg6[%c0_27, %c0_28, %c0_29], %47 {strides = array<i32>} : memref<2x8x8xf32, #tpu.memory_space<vmem>>, vector<2x8x8xf32>,
    return
  }
  func.func @transform_0(%arg0: i32, %arg1: i32) -> (i32, i32, i32) {
    %c0_i32 = arith.constant 0 : i32
    %c0_i32_0 = arith.constant 0 : i32
    return %arg0, %arg1, %c0_i32 : i32, i32, i32
  }
  func.func @transform_1(%arg0: i32, %arg1: i32) -> (i32, i32, i32) {
    %c0_i32 = arith.constant 0 : i32
    %c0_i32_0 = arith.constant 0 : i32
    %c0_i32_1 = arith.constant 0 : i32
    return %arg0, %c0_i32, %c0_i32_0 : i32, i32, i32
  }
  func.func @transform_2(%arg0: i32, %arg1: i32) -> (i32, i32, i32) {
    %c0_i32 = arith.constant 0 : i32
    %c0_i32_0 = arith.constant 0 : i32
    %c0_i32_1 = arith.constant 0 : i32
    return %arg0, %c0_i32, %c0_i32_0 : i32, i32, i32
  }
  func.func @transform_3(%arg0: i32, %arg1: i32) -> (i32, i32, i32) {
    %c0_i32 = arith.constant 0 : i32
    %c0_i32_0 = arith.constant 0 : i32
    return %arg0, %arg1, %c0_i32 : i32, i32, i32
  }
  func.func @transform_4(%arg0: i32, %arg1: i32) -> (i32, i32, i32) {
    %c0_i32 = arith.constant 0 : i32
    %c0_i32_0 = arith.constant 0 : i32
    return %arg0, %arg1, %c0_i32 : i32, i32, i32
  }
}

module attributes {stable_mosaic.version = 11 : i64} {
  func.func @_sdpa_kernel(%arg0: i32, %arg1: i32, %arg2: memref<2x8x32xf32, #tpu.memory_space<vmem>>, %arg3: memref<2x8x32xf32, #tpu.memory_space<vmem>>, %arg4: memref<2x8x32xf32, #tpu.memory_space<vmem>>, %arg5: memref<2x8x32xf32, #tpu.memory_space<vmem>>, %arg6: memref<2x8x8xf32, #tpu.memory_space<vmem>>) attributes {dimension_semantics = [#tpu.dimension_semantics<parallel>, #tpu.dimension_semantics<parallel>], iteration_bounds = array<i64: 1, 1>, scalar_prefetch = 0 : i64, scratch_operands = 0 : i64, tpu.core_type = #tpu.core_type<tc>, window_params = [{transform_indices = @transform_0, window_bounds = array<i64: 2, 8, 32>}, {transform_indices = @transform_1, window_bounds = array<i64: 2, 8, 32>}, {transform_indices = @transform_2, window_bounds = array<i64: 2, 8, 32>}, {transform_indices = @transform_3, window_bounds = array<i64: 2, 8, 32>}, {transform_indices = @transform_4, window_bounds = array<i64: 2, 8, 8>}]} {
    %c0 = arith.constant 0 : index
    %c0_0 = arith.constant 0 : index
    %c0_1 = arith.constant 0 : index
    %0 = vector.load %arg2[%c0, %c0_0, %c0_1] : memref<2x8x32xf32, #tpu.memory_space<vmem>>, vector<2x8x32xf32>
    %c0_2 = arith.constant 0 : index
    %c0_3 = arith.constant 0 : index
    %c0_4 = arith.constant 0 : index
    %1 = vector.load %arg3[%c0_2, %c0_3, %c0_4] : memref<2x8x32xf32, #tpu.memory_space<vmem>>, vector<2x8x32xf32>
    %cst = arith.constant dense<0.000000e+00> : vector<2x8x8xf32>
    %2 = tpu.matmul %0, %1, %cst {dimension_numbers = #tpu.dot_dimension_numbers<[2], [2], [1], [1], [0, 0, 0, 1, 1, 1], [0], [0]>} : vector<2x8x32xf32>, vector<2x8x32xf32>, vector<2x8x8xf32> -> vector<2x8x8xf32>
    %cst_5 = arith.constant 0.176776692 : f32
    %3 = vector.broadcast %cst_5 : f32 to vector<2x8x8xf32>
    %4 = arith.mulf %2, %3 : vector<2x8x8xf32>
    %cst_6 = arith.constant dense<0xFF800000> : vector<2x8xf32>
    %5 = vector.multi_reduction <maximumf>, %4, %cst_6 [2] : vector<2x8x8xf32> to vector<2x8xf32>
    %6 = vector.shape_cast %5 : vector<2x8xf32> to vector<2x8x1xf32>
    %7 = vector.broadcast %6 : vector<2x8x1xf32> to vector<2x8x8xf32>
    %8 = arith.subf %4, %7 : vector<2x8x8xf32>
    %9 = math.exp %8 : vector<2x8x8xf32>
    %cst_7 = arith.constant dense<0.000000e+00> : vector<2x8xf32>
    %10 = vector.multi_reduction <add>, %9, %cst_7 [2] : vector<2x8x8xf32> to vector<2x8xf32>
    %11 = vector.shape_cast %10 : vector<2x8xf32> to vector<2x8x1xf32>
    %cst_8 = arith.constant dense<0xFF800000> : vector<2x8xf32>
    %12 = vector.multi_reduction <maximumf>, %9, %cst_8 [2] : vector<2x8x8xf32> to vector<2x8xf32>
    %13 = vector.shape_cast %12 : vector<2x8xf32> to vector<2x8x1xf32>
    %c0_i32 = arith.constant 0 : i32
    %14 = vector.broadcast %13 : vector<2x8x1xf32> to vector<2x8x8xf32>
    %15 = arith.cmpf oge, %9, %14 : vector<2x8x8xf32>
    %cst_9 = arith.constant -1.000000e+00 : f32
    %16 = vector.broadcast %cst_9 : f32 to vector<2x8x8xf32>
    %17 = arith.select %15, %16, %9 : vector<2x8x8xi1>, vector<2x8x8xf32>
    %cst_10 = arith.constant dense<0xFF800000> : vector<2x8xf32>
    %18 = vector.multi_reduction <maximumf>, %17, %cst_10 [2] : vector<2x8x8xf32> to vector<2x8xf32>
    %19 = vector.shape_cast %18 : vector<2x8xf32> to vector<2x8x1xf32>
    %c1_i32 = arith.constant 1 : i32
    %20 = vector.broadcast %19 : vector<2x8x1xf32> to vector<2x8x8xf32>
    %21 = arith.cmpf oge, %17, %20 : vector<2x8x8xf32>
    %cst_11 = arith.constant -1.000000e+00 : f32
    %22 = vector.broadcast %cst_11 : f32 to vector<2x8x8xf32>
    %23 = arith.select %21, %22, %17 : vector<2x8x8xi1>, vector<2x8x8xf32>
    %cst_12 = arith.constant dense<0xFF800000> : vector<2x8xf32>
    %24 = vector.multi_reduction <maximumf>, %23, %cst_12 [2] : vector<2x8x8xf32> to vector<2x8xf32>
    %25 = vector.shape_cast %24 : vector<2x8xf32> to vector<2x8x1xf32>
    %c2_i32 = arith.constant 2 : i32
    %26 = vector.broadcast %25 : vector<2x8x1xf32> to vector<2x8x8xf32>
    %27 = arith.cmpf oge, %23, %26 : vector<2x8x8xf32>
    %cst_13 = arith.constant -1.000000e+00 : f32
    %28 = vector.broadcast %cst_13 : f32 to vector<2x8x8xf32>
    %29 = arith.select %27, %28, %23 : vector<2x8x8xi1>, vector<2x8x8xf32>
    %cst_14 = arith.constant dense<0xFF800000> : vector<2x8xf32>
    %30 = vector.multi_reduction <maximumf>, %29, %cst_14 [2] : vector<2x8x8xf32> to vector<2x8xf32>
    %31 = vector.shape_cast %30 : vector<2x8xf32> to vector<2x8x1xf32>
    %cst_15 = arith.constant 1.000000e-07 : f32
    %32 = vector.broadcast %cst_15 : f32 to vector<2x8x1xf32>
    %33 = arith.mulf %32, %11 : vector<2x8x1xf32>
    %34 = arith.addf %31, %33 : vector<2x8x1xf32>
    %35 = vector.broadcast %34 : vector<2x8x1xf32> to vector<2x8x8xf32>
    %36 = arith.subf %9, %35 : vector<2x8x8xf32>
    %cst_16 = arith.constant 0.000000e+00 : f32
    %37 = vector.broadcast %cst_16 : f32 to vector<2x8x8xf32>
    %38 = arith.maximumf %36, %37 : vector<2x8x8xf32>
    %cst_17 = arith.constant dense<0.000000e+00> : vector<2x8xf32>
    %39 = vector.multi_reduction <add>, %38, %cst_17 [2] : vector<2x8x8xf32> to vector<2x8xf32>
    %40 = vector.shape_cast %39 : vector<2x8xf32> to vector<2x8x1xf32>
    %cst_18 = arith.constant 1.000000e-07 : f32
    %41 = vector.broadcast %cst_18 : f32 to vector<2x8x1xf32>
    %42 = arith.mulf %41, %11 : vector<2x8x1xf32>
    %43 = arith.addf %40, %42 : vector<2x8x1xf32>
    %cst_19 = arith.constant 1.000000e+00 : f32
    %44 = vector.broadcast %cst_19 : f32 to vector<2x8x1xf32>
    %45 = arith.divf %44, %43 : vector<2x8x1xf32>
    %46 = vector.broadcast %45 : vector<2x8x1xf32> to vector<2x8x8xf32>
    %47 = arith.mulf %38, %46 : vector<2x8x8xf32>
    %c0_20 = arith.constant 0 : index
    %c0_21 = arith.constant 0 : index
    %c0_22 = arith.constant 0 : index
    %48 = vector.load %arg4[%c0_20, %c0_21, %c0_22] : memref<2x8x32xf32, #tpu.memory_space<vmem>>, vector<2x8x32xf32>
    %cst_23 = arith.constant dense<0.000000e+00> : vector<2x8x32xf32>
    %49 = tpu.matmul %47, %48, %cst_23 {dimension_numbers = #tpu.dot_dimension_numbers<[2], [1], [1], [2], [0, 0, 0, 1, 1, 2], [0], [0]>} : vector<2x8x8xf32>, vector<2x8x32xf32>, vector<2x8x32xf32> -> vector<2x8x32xf32>
    %c0_24 = arith.constant 0 : index
    %c0_25 = arith.constant 0 : index
    %c0_26 = arith.constant 0 : index
    %50 = vector.load %arg5[%c0_24, %c0_25, %c0_26] : memref<2x8x32xf32, #tpu.memory_space<vmem>>, vector<2x8x32xf32>
    tpu.vector_store %arg5[%c0_24, %c0_25, %c0_26], %49 {strides = array<i32>} : memref<2x8x32xf32, #tpu.memory_space<vmem>>, vector<2x8x32xf32>,
    %c0_27 = arith.constant 0 : index
    %c0_28 = arith.constant 0 : index
    %c0_29 = arith.constant 0 : index
    %51 = vector.load %arg6[%c0_27, %c0_28, %c0_29] : memref<2x8x8xf32, #tpu.memory_space<vmem>>, vector<2x8x8xf32>
    tpu.vector_store %arg6[%c0_27, %c0_28, %c0_29], %47 {strides = array<i32>} : memref<2x8x8xf32, #tpu.memory_space<vmem>>, vector<2x8x8xf32>,
    return
  }
  func.func @transform_0(%arg0: i32, %arg1: i32) -> (i32, i32, i32) {
    %c0_i32 = arith.constant 0 : i32
    %c0_i32_0 = arith.constant 0 : i32
    return %arg0, %arg1, %c0_i32 : i32, i32, i32
  }
  func.func @transform_1(%arg0: i32, %arg1: i32) -> (i32, i32, i32) {
    %c0_i32 = arith.constant 0 : i32
    %c0_i32_0 = arith.constant 0 : i32
    %c0_i32_1 = arith.constant 0 : i32
    return %arg0, %c0_i32, %c0_i32_0 : i32, i32, i32
  }
  func.func @transform_2(%arg0: i32, %arg1: i32) -> (i32, i32, i32) {
    %c0_i32 = arith.constant 0 : i32
    %c0_i32_0 = arith.constant 0 : i32
    %c0_i32_1 = arith.constant 0 : i32
    return %arg0, %c0_i32, %c0_i32_0 : i32, i32, i32
  }
  func.func @transform_3(%arg0: i32, %arg1: i32) -> (i32, i32, i32) {
    %c0_i32 = arith.constant 0 : i32
    %c0_i32_0 = arith.constant 0 : i32
    return %arg0, %arg1, %c0_i32 : i32, i32, i32
  }
  func.func @transform_4(%arg0: i32, %arg1: i32) -> (i32, i32, i32) {
    %c0_i32 = arith.constant 0 : i32
    %c0_i32_0 = arith.constant 0 : i32
    return %arg0, %arg1, %c0_i32 : i32, i32, i32
  }
}

</mosaic_0001>

<llo_original>
// kernel: tpu_custom_call.1
$region0: #{tpu_custom_call.1}
  #allocation0 [shape = 'u32[]', space=smem, size = 0x4, offset = 0x4, fixed_abs, tag = 'smem constant byte address 0x4 - core index']
  #allocation1 [shape = 'u32[144,128]{1,0:T(1,128)}', space=vmem, size = 0x12000, scoped, tag = 'internal scratch']
  %s0 = inlined_call_operand.hbm [shape: f32[2,8,32], index: 0, kind: input, shape index: {}]
  %s1 = inlined_call_operand.hbm [shape: f32[2,8,32], index: 1, kind: input, shape index: {}]
  %s2 = inlined_call_operand.hbm [shape: f32[2,8,32], index: 2, kind: input, shape index: {}]
  %s3 = inlined_call_operand.hbm [shape: f32[2,8,32], index: 3, kind: output, shape index: {0}]
  %s4 = inlined_call_operand.hbm [shape: f32[2,8,8], index: 4, kind: output, shape index: {1}]
  %5 = xla_tuple %s3, %s4
  %s6 = sld [smem:[#allocation0]]
  $region42: #{tpu_custom_call.1} parent=0
    _
  %s8 = ssub.s32 1, %s6
  %s9 = scalar_select 0, %s8, %s6
  $region1: #{tpu_custom_call.1} parent=0
    #allocation2 [shape = 'u8[8192]{0}', space=vmem, size = 0x2000, scoped, tag = 'input window, operand 0, single buffered']
    #allocation3 [shape = 's32[1]{0}', space=sflag, size = 0x4, scoped, tag = 'scoped memory for tpu_custom_call.1']
    #allocation4 [shape = 's32[1]{0}', space=sflag, size = 0x4, scoped, tag = 'scoped memory for tpu_custom_call.1']
    #allocation5 [shape = 'u8[8192]{0}', space=vmem, size = 0x2000, scoped, tag = 'input window, operand 1, single buffered']
    #allocation6 [shape = 's32[1]{0}', space=sflag, size = 0x4, scoped, tag = 'scoped memory for tpu_custom_call.1']
    #allocation7 [shape = 'u8[8192]{0}', space=vmem, size = 0x2000, scoped, tag = 'input window, operand 2, single buffered']
    #allocation8 [shape = 'u8[8192]{0}', space=vmem, size = 0x2000, scoped, tag = 'output window, operand 0, single buffered']
    #allocation9 [shape = 'u8[8192]{0}', space=vmem, size = 0x2000, scoped, tag = 'output window, operand 1, single buffered']
    #allocation10 [shape = 's32[1]{0}', space=sflag, size = 0x4, scoped, tag = 'scoped memory for tpu_custom_call.1']
    %10 = vsyncpa [#allocation3], 0
    %11 = vsyncpa [#allocation6], 0
    %12 = vsyncpa [#allocation4], 0
    %13 = vsyncpa [#allocation10], 0
    // Predicated region
    $region2: #{tpu_custom_call.1} parent=1 // pred_check
      _
    $region3: #{tpu_custom_call.1} parent=1 // pred_check_branch
      %15 = sbr.rel (0) target = $region5
    $region4: #{tpu_custom_call.1} parent=1 // pred_region
      %s17 = ssub.s32 256, 256
      %18 = vsyncadd [#allocation3], %s17
      %s19 = sshll.u32 [#allocation2], 4
      %s20 = int_to_ptr.vmem [resolvable:$true] %s19
      %25 = dma.hbm_to_vmem [thread:$0]  %s0, 256, %s20, [#allocation3], 128, 128, 8
    $region5: #{tpu_custom_call.1} parent=1 // pred_fallthru
      _
    // Predicated region
    $region6: #{tpu_custom_call.1} parent=1 // pred_check
      _
    $region7: #{tpu_custom_call.1} parent=1 // pred_check_branch
      %27 = sbr.rel (0) target = $region9
    $region8: #{tpu_custom_call.1} parent=1 // pred_region
      %s29 = ssub.s32 256, 256
      %30 = vsyncadd [#allocation6], %s29
      %s31 = sshll.u32 [#allocation5], 4
      %s32 = int_to_ptr.vmem [resolvable:$true] %s31
      %37 = dma.hbm_to_vmem [thread:$0]  %s1, 256, %s32, [#allocation6], 128, 128, 8
    $region9: #{tpu_custom_call.1} parent=1 // pred_fallthru
      _
    // Predicated region
    $region10: #{tpu_custom_call.1} parent=1 // pred_check
      _
    $region11: #{tpu_custom_call.1} parent=1 // pred_check_branch
      %39 = sbr.rel (0) target = $region13
    $region12: #{tpu_custom_call.1} parent=1 // pred_region
      %s41 = ssub.s32 256, 256
      %42 = vsyncadd [#allocation6], %s41
      %s43 = sshll.u32 [#allocation7], 4
      %s44 = int_to_ptr.vmem [resolvable:$true] %s43
      %49 = dma.hbm_to_vmem [thread:$0]  %s2, 256, %s44, [#allocation6], 128, 128, 8
    $region13: #{tpu_custom_call.1} parent=1 // pred_fallthru
      _
    // Predicated region
    $region14: #{tpu_custom_call.1} parent=1 // pred_check
      _
    $region15: #{tpu_custom_call.1} parent=1 // pred_check_branch
      %51 = sbr.rel (0) target = $region17
    $region16: #{tpu_custom_call.1} parent=1 // pred_region
      %52 = dma.done [#allocation3], 256
    $region17: #{tpu_custom_call.1} parent=1 // pred_fallthru
      _
    // Predicated region
    $region18: #{tpu_custom_call.1} parent=1 // pred_check
      _
    $region19: #{tpu_custom_call.1} parent=1 // pred_check_branch
      %54 = sbr.rel (0) target = $region21
    $region20: #{tpu_custom_call.1} parent=1 // pred_region
      %55 = dma.done [#allocation6], 256
    $region21: #{tpu_custom_call.1} parent=1 // pred_fallthru
      _
    // Predicated region
    $region22: #{tpu_custom_call.1} parent=1 // pred_check
      _
    $region23: #{tpu_custom_call.1} parent=1 // pred_check_branch
      %57 = sbr.rel (0) target = $region25
    $region24: #{tpu_custom_call.1} parent=1 // pred_region
      %58 = dma.done [#allocation6], 256
    $region25: #{tpu_custom_call.1} parent=1 // pred_fallthru
      _
    %v59 = vld [vmem:[#allocation2] sm:$0xff]
    %v60 = vld [vmem:[#allocation2 + $0x8] sm:$0xff]
    %v61 = vld [vmem:[#allocation5] sm:$0xff]
    %v62 = vld [vmem:[#allocation5 + $0x8] sm:$0xff]
    %vm63 = vcmask 261120
    %v65 = vsel %vm63, %v59, 0
    %v68 = vsel %vm63, %v61, 0
    %70 = vmatprep.subr.mxu0 0.0
    %v71 = vand.u32 %v68, 4294901760
    %72 = vmatpush1.xpose.msra.mxu0 %v71
    %73 = vmatprep.subr.mxu0 0.0
    %74 = vmatpush1.xpose.msra.mxu0 0.0
    %75 = vmatprep.subr.mxu0 0.0
    %76 = vmatpush1.xpose.msra.mxu0 0.0
    %77 = vmatprep.subr.mxu0 0.0
    %78 = vmatpush1.xpose.msra.mxu0 0.0
    %79 = vmatprep.subr.mxu0 0.0
    %80 = vmatpush1.xpose.msra.mxu0 0.0
    %81 = vmatprep.subr.mxu0 0.0
    %82 = vmatpush1.xpose.msra.mxu0 0.0
    %83 = vmatprep.subr.mxu0 0.0
    %84 = vmatpush1.xpose.msra.mxu0 0.0
    %85 = vmatprep.subr.mxu0 0.0
    %86 = vmatpush1.xpose.msra.mxu0 0.0
    %87 = vmatprep.subr.mxu0 0.0
    %88 = vmatpush1.xpose.msra.mxu0 0.0
    %89 = vmatprep.subr.mxu0 0.0
    %90 = vmatpush1.xpose.msra.mxu0 0.0
    %91 = vmatprep.subr.mxu0 0.0
    %92 = vmatpush1.xpose.msra.mxu0 0.0
    %93 = vmatprep.subr.mxu0 0.0
    %94 = vmatpush1.xpose.msra.mxu0 0.0
    %95 = vmatprep.subr.mxu0 0.0
    %96 = vmatpush1.xpose.msra.mxu0 0.0
    %97 = vmatprep.subr.mxu0 0.0
    %98 = vmatpush1.xpose.msra.mxu0 0.0
    %99 = vmatprep.subr.mxu0 0.0
    %100 = vmatpush1.xpose.msra.mxu0 0.0
    %101 = vmatprep.subr.mxu0 0.0
    %102 = vmatpush1.xpose.msra.mxu0 0.0
    %103 = vmatprep.subr.mxu0 0.0
    %104 = vmatpush1.xpose.msra.mxu0 0.0
    %105 = vmatprep.subr.mxu0 0.0
    %106 = vmatpush1.xpose.msra.mxu0 0.0
    %107 = vmatprep.subr.mxu0 0.0
    %108 = vmatpush1.xpose.msra.mxu0 0.0
    %109 = vmatprep.subr.mxu0 0.0
    %110 = vmatpush1.xpose.msra.mxu0 0.0
    %111 = vmatprep.subr.mxu0 0.0
    %112 = vmatpush1.xpose.msra.mxu0 0.0
    %113 = vmatprep.subr.mxu0 0.0
    %114 = vmatpush1.xpose.msra.mxu0 0.0
    %115 = vmatprep.subr.mxu0 0.0
    %116 = vmatpush1.xpose.msra.mxu0 0.0
    %117 = vmatprep.subr.mxu0 0.0
    %118 = vmatpush1.xpose.msra.mxu0 0.0
    %119 = vmatprep.subr.mxu0 0.0
    %120 = vmatpush1.xpose.msra.mxu0 0.0
    %121 = vmatprep.subr.mxu0 0.0
    %122 = vmatpush1.xpose.msra.mxu0 0.0
    %123 = vmatprep.subr.mxu0 0.0
    %124 = vmatpush1.xpose.msra.mxu0 0.0
    %125 = vmatprep.subr.mxu0 0.0
    %126 = vmatpush1.xpose.msra.mxu0 0.0
    %127 = vmatprep.subr.mxu0 0.0
    %128 = vmatpush1.xpose.msra.mxu0 0.0
    %129 = vmatprep.subr.mxu0 0.0
    %130 = vmatpush1.xpose.msra.mxu0 0.0
    %131 = vmatprep.subr.mxu0 0.0
    %132 = vmatpush1.xpose.msra.mxu0 0.0
    %133 = vmatprep.subr.mxu0 0.0
    %134 = vmatpush1.xpose.msra.mxu0 0.0
    %135 = vmatprep.mubr.f32.mxu0 0.0
    %v136 = vand.u32 %v65, 4294901760
    %v137 = vsub.f32 %v65, %v136
    %v138 = vand.u32 %v137, 4294901760
    %v139 = vsub.f32 %v137, %v138
    %v140 = vand.u32 %v139, 4294901760
    %141 = vmatmul.mubr.f32.gmra.mrb[0].mxu0 %v140
    %v142 = vpop.f32.mrb[0].mxu0
    %v143 = vadd.f32 0.0, %v142
    %v144 = vpop.f32.mrb[0].mxu0
    %145 = vdwg.mxu0
    %146 = vmatprep.subr.mxu0 0.0
    %v147 = vand.u32 %v68, 4294901760
    %v148 = vsub.f32 %v68, %v147
    %v149 = vand.u32 %v148, 4294901760
    %v150 = vsub.f32 %v148, %v149
    %v151 = vand.u32 %v150, 4294901760
    %152 = vmatpush1.xpose.msra.mxu0 %v151
    %153 = vmatprep.subr.mxu0 0.0
    %154 = vmatpush1.xpose.msra.mxu0 0.0
    %155 = vmatprep.subr.mxu0 0.0
    %156 = vmatpush1.xpose.msra.mxu0 0.0
    %157 = vmatprep.subr.mxu0 0.0
    %158 = vmatpush1.xpose.msra.mxu0 0.0
    %159 = vmatprep.subr.mxu0 0.0
    %160 = vmatpush1.xpose.msra.mxu0 0.0
    %161 = vmatprep.subr.mxu0 0.0
    %162 = vmatpush1.xpose.msra.mxu0 0.0
    %163 = vmatprep.subr.mxu0 0.0
    %164 = vmatpush1.xpose.msra.mxu0 0.0
    %165 = vmatprep.subr.mxu0 0.0
    %166 = vmatpush1.xpose.msra.mxu0 0.0
    %167 = vmatprep.subr.mxu0 0.0
    %168 = vmatpush1.xpose.msra.mxu0 0.0
    %169 = vmatprep.subr.mxu0 0.0
    %170 = vmatpush1.xpose.msra.mxu0 0.0
    %171 = vmatprep.subr.mxu0 0.0
    %172 = vmatpush1.xpose.msra.mxu0 0.0
    %173 = vmatprep.subr.mxu0 0.0
    %174 = vmatpush1.xpose.msra.mxu0 0.0
    %175 = vmatprep.subr.mxu0 0.0
    %176 = vmatpush1.xpose.msra.mxu0 0.0
    %177 = vmatprep.subr.mxu0 0.0
    %178 = vmatpush1.xpose.msra.mxu0 0.0
    %179 = vmatprep.subr.mxu0 0.0
    %180 = vmatpush1.xpose.msra.mxu0 0.0
    %181 = vmatprep.subr.mxu0 0.0
    %182 = vmatpush1.xpose.msra.mxu0 0.0
    %183 = vmatprep.subr.mxu0 0.0
    %184 = vmatpush1.xpose.msra.mxu0 0.0
    %185 = vmatprep.subr.mxu0 0.0
    %186 = vmatpush1.xpose.msra.mxu0 0.0
    %187 = vmatprep.subr.mxu0 0.0
    %188 = vmatpush1.xpose.msra.mxu0 0.0
    %189 = vmatprep.subr.mxu0 0.0
    %190 = vmatpush1.xpose.msra.mxu0 0.0
    %191 = vmatprep.subr.mxu0 0.0
    %192 = vmatpush1.xpose.msra.mxu0 0.0
    %193 = vmatprep.subr.mxu0 0.0
    %194 = vmatpush1.xpose.msra.mxu0 0.0
    %195 = vmatprep.subr.mxu0 0.0
    %196 = vmatpush1.xpose.msra.mxu0 0.0
    %197 = vmatprep.subr.mxu0 0.0
    %198 = vmatpush1.xpose.msra.mxu0 0.0
    %199 = vmatprep.subr.mxu0 0.0
    %200 = vmatpush1.xpose.msra.mxu0 0.0
    %201 = vmatprep.subr.mxu0 0.0
    %202 = vmatpush1.xpose.msra.mxu0 0.0
    %203 = vmatprep.subr.mxu0 0.0
    %204 = vmatpush1.xpose.msra.mxu0 0.0
    %205 = vmatprep.subr.mxu0 0.0
    %206 = vmatpush1.xpose.msra.mxu0 0.0
    %207 = vmatprep.subr.mxu0 0.0
    %208 = vmatpush1.xpose.msra.mxu0 0.0
    %209 = vmatprep.subr.mxu0 0.0
    %210 = vmatpush1.xpose.msra.mxu0 0.0
    %211 = vmatprep.subr.mxu0 0.0
    %212 = vmatpush1.xpose.msra.mxu0 0.0
    %213 = vmatprep.subr.mxu0 0.0
    %214 = vmatpush1.xpose.msra.mxu0 0.0
    %215 = vmatprep.mubr.f32.mxu0 0.0
    %v216 = vand.u32 %v65, 4294901760
    %217 = vmatmul.mubr.f32.gmra.mrb[0].mxu0 %v216
    %v218 = vpop.f32.mrb[0].mxu0
    %v219 = vadd.f32 %v143, %v218
    %v220 = vpop.f32.mrb[0].mxu0
    %221 = vdwg.mxu0
    %222 = vmatprep.subr.mxu0 0.0
    %v223 = vand.u32 %v68, 4294901760
    %v224 = vsub.f32 %v68, %v223
    %225 = vmatpush1.xpose.msra.mxu0 %v224
    %226 = vmatprep.subr.mxu0 0.0
    %227 = vmatpush1.xpose.msra.mxu0 0.0
    %228 = vmatprep.subr.mxu0 0.0
    %229 = vmatpush1.xpose.msra.mxu0 0.0
    %230 = vmatprep.subr.mxu0 0.0
    %231 = vmatpush1.xpose.msra.mxu0 0.0
    %232 = vmatprep.subr.mxu0 0.0
    %233 = vmatpush1.xpose.msra.mxu0 0.0
    %234 = vmatprep.subr.mxu0 0.0
    %235 = vmatpush1.xpose.msra.mxu0 0.0
    %236 = vmatprep.subr.mxu0 0.0
    %237 = vmatpush1.xpose.msra.mxu0 0.0
    %238 = vmatprep.subr.mxu0 0.0
    %239 = vmatpush1.xpose.msra.mxu0 0.0
    %240 = vmatprep.subr.mxu0 0.0
    %241 = vmatpush1.xpose.msra.mxu0 0.0
    %242 = vmatprep.subr.mxu0 0.0
    %243 = vmatpush1.xpose.msra.mxu0 0.0
    %244 = vmatprep.subr.mxu0 0.0
    %245 = vmatpush1.xpose.msra.mxu0 0.0
    %246 = vmatprep.subr.mxu0 0.0
    %247 = vmatpush1.xpose.msra.mxu0 0.0
    %248 = vmatprep.subr.mxu0 0.0
    %249 = vmatpush1.xpose.msra.mxu0 0.0
    %250 = vmatprep.subr.mxu0 0.0
    %251 = vmatpush1.xpose.msra.mxu0 0.0
    %252 = vmatprep.subr.mxu0 0.0
    %253 = vmatpush1.xpose.msra.mxu0 0.0
    %254 = vmatprep.subr.mxu0 0.0
    %255 = vmatpush1.xpose.msra.mxu0 0.0
    %256 = vmatprep.subr.mxu0 0.0
    %257 = vmatpush1.xpose.msra.mxu0 0.0
    %258 = vmatprep.subr.mxu0 0.0
    %259 = vmatpush1.xpose.msra.mxu0 0.0
    %260 = vmatprep.subr.mxu0 0.0
    %261 = vmatpush1.xpose.msra.mxu0 0.0
    %262 = vmatprep.subr.mxu0 0.0
    %263 = vmatpush1.xpose.msra.mxu0 0.0
    %264 = vmatprep.subr.mxu0 0.0
    %265 = vmatpush1.xpose.msra.mxu0 0.0
    %266 = vmatprep.subr.mxu0 0.0
    %267 = vmatpush1.xpose.msra.mxu0 0.0
    %268 = vmatprep.subr.mxu0 0.0
    %269 = vmatpush1.xpose.msra.mxu0 0.0
    %270 = vmatprep.subr.mxu0 0.0
    %271 = vmatpush1.xpose.msra.mxu0 0.0
    %272 = vmatprep.subr.mxu0 0.0
    %273 = vmatpush1.xpose.msra.mxu0 0.0
    %274 = vmatprep.subr.mxu0 0.0
    %275 = vmatpush1.xpose.msra.mxu0 0.0
    %276 = vmatprep.subr.mxu0 0.0
    %277 = vmatpush1.xpose.msra.mxu0 0.0
    %278 = vmatprep.subr.mxu0 0.0
    %279 = vmatpush1.xpose.msra.mxu0 0.0
    %280 = vmatprep.subr.mxu0 0.0
    %281 = vmatpush1.xpose.msra.mxu0 0.0
    %282 = vmatprep.subr.mxu0 0.0
    %283 = vmatpush1.xpose.msra.mxu0 0.0
    %284 = vmatprep.subr.mxu0 0.0
    %285 = vmatpush1.xpose.msra.mxu0 0.0
    %286 = vmatprep.subr.mxu0 0.0
    %287 = vmatpush1.xpose.msra.mxu0 0.0
    %288 = vmatprep.mubr.f32.mxu0 0.0
    %v289 = vand.u32 %v65, 4294901760
    %v290 = vsub.f32 %v65, %v289
    %291 = vmatmul.mubr.f32.gmra.mrb[0].mxu0 %v290
    %v292 = vpop.f32.mrb[0].mxu0
    %v293 = vadd.f32 %v219, %v292
    %v294 = vpop.f32.mrb[0].mxu0
    %295 = vdwg.mxu0
    %296 = vmatprep.subr.mxu0 0.0
    %v297 = vand.u32 %v68, 4294901760
    %298 = vmatpush1.xpose.msra.mxu0 %v297
    %299 = vmatprep.subr.mxu0 0.0
    %300 = vmatpush1.xpose.msra.mxu0 0.0
    %301 = vmatprep.subr.mxu0 0.0
    %302 = vmatpush1.xpose.msra.mxu0 0.0
    %303 = vmatprep.subr.mxu0 0.0
    %304 = vmatpush1.xpose.msra.mxu0 0.0
    %305 = vmatprep.subr.mxu0 0.0
    %306 = vmatpush1.xpose.msra.mxu0 0.0
    %307 = vmatprep.subr.mxu0 0.0
    %308 = vmatpush1.xpose.msra.mxu0 0.0
    %309 = vmatprep.subr.mxu0 0.0
    %310 = vmatpush1.xpose.msra.mxu0 0.0
    %311 = vmatprep.subr.mxu0 0.0
    %312 = vmatpush1.xpose.msra.mxu0 0.0
    %313 = vmatprep.subr.mxu0 0.0
    %314 = vmatpush1.xpose.msra.mxu0 0.0
    %315 = vmatprep.subr.mxu0 0.0
    %316 = vmatpush1.xpose.msra.mxu0 0.0
    %317 = vmatprep.subr.mxu0 0.0
    %318 = vmatpush1.xpose.msra.mxu0 0.0
    %319 = vmatprep.subr.mxu0 0.0
    %320 = vmatpush1.xpose.msra.mxu0 0.0
    %321 = vmatprep.subr.mxu0 0.0
    %322 = vmatpush1.xpose.msra.mxu0 0.0
    %323 = vmatprep.subr.mxu0 0.0
    %324 = vmatpush1.xpose.msra.mxu0 0.0
    %325 = vmatprep.subr.mxu0 0.0
    %326 = vmatpush1.xpose.msra.mxu0 0.0
    %327 = vmatprep.subr.mxu0 0.0
    %328 = vmatpush1.xpose.msra.mxu0 0.0
    %329 = vmatprep.subr.mxu0 0.0
    %330 = vmatpush1.xpose.msra.mxu0 0.0
    %331 = vmatprep.subr.mxu0 0.0
    %332 = vmatpush1.xpose.msra.mxu0 0.0
    %333 = vmatprep.subr.mxu0 0.0
    %334 = vmatpush1.xpose.msra.mxu0 0.0
    %335 = vmatprep.subr.mxu0 0.0
    %336 = vmatpush1.xpose.msra.mxu0 0.0
    %337 = vmatprep.subr.mxu0 0.0
    %338 = vmatpush1.xpose.msra.mxu0 0.0
    %339 = vmatprep.subr.mxu0 0.0
    %340 = vmatpush1.xpose.msra.mxu0 0.0
    %341 = vmatprep.subr.mxu0 0.0
    %342 = vmatpush1.xpose.msra.mxu0 0.0
    %343 = vmatprep.subr.mxu0 0.0
    %344 = vmatpush1.xpose.msra.mxu0 0.0
    %345 = vmatprep.subr.mxu0 0.0
    %346 = vmatpush1.xpose.msra.mxu0 0.0
    %347 = vmatprep.subr.mxu0 0.0
    %348 = vmatpush1.xpose.msra.mxu0 0.0
    %349 = vmatprep.subr.mxu0 0.0
    %350 = vmatpush1.xpose.msra.mxu0 0.0
    %351 = vmatprep.subr.mxu0 0.0
    %352 = vmatpush1.xpose.msra.mxu0 0.0
    %353 = vmatprep.subr.mxu0 0.0
    %354 = vmatpush1.xpose.msra.mxu0 0.0
    %355 = vmatprep.subr.mxu0 0.0
    %356 = vmatpush1.xpose.msra.mxu0 0.0
    %357 = vmatprep.subr.mxu0 0.0
    %358 = vmatpush1.xpose.msra.mxu0 0.0
    %359 = vmatprep.subr.mxu0 0.0
    %360 = vmatpush1.xpose.msra.mxu0 0.0
    %361 = vmatprep.mubr.f32.mxu0 0.0
    %v362 = vand.u32 %v65, 4294901760
    %v363 = vsub.f32 %v65, %v362
    %v364 = vand.u32 %v363, 4294901760
    %365 = vmatmul.mubr.f32.gmra.mrb[0].mxu0 %v364
    %v366 = vpop.f32.mrb[0].mxu0
    %v367 = vadd.f32 %v293, %v366
    %v368 = vpop.f32.mrb[0].mxu0
    %369 = vdwg.mxu0
    %370 = vmatprep.subr.mxu0 0.0
    %v371 = vand.u32 %v68, 4294901760
    %v372 = vsub.f32 %v68, %v371
    %v373 = vand.u32 %v372, 4294901760
    %374 = vmatpush1.xpose.msra.mxu0 %v373
    %375 = vmatprep.subr.mxu0 0.0
    %376 = vmatpush1.xpose.msra.mxu0 0.0
    %377 = vmatprep.subr.mxu0 0.0
    %378 = vmatpush1.xpose.msra.mxu0 0.0
    %379 = vmatprep.subr.mxu0 0.0
    %380 = vmatpush1.xpose.msra.mxu0 0.0
    %381 = vmatprep.subr.mxu0 0.0
    %382 = vmatpush1.xpose.msra.mxu0 0.0
    %383 = vmatprep.subr.mxu0 0.0
    %384 = vmatpush1.xpose.msra.mxu0 0.0
    %385 = vmatprep.subr.mxu0 0.0
    %386 = vmatpush1.xpose.msra.mxu0 0.0
    %387 = vmatprep.subr.mxu0 0.0
    %388 = vmatpush1.xpose.msra.mxu0 0.0
    %389 = vmatprep.subr.mxu0 0.0
    %390 = vmatpush1.xpose.msra.mxu0 0.0
    %391 = vmatprep.subr.mxu0 0.0
    %392 = vmatpush1.xpose.msra.mxu0 0.0
    %393 = vmatprep.subr.mxu0 0.0
    %394 = vmatpush1.xpose.msra.mxu0 0.0
    %395 = vmatprep.subr.mxu0 0.0
    %396 = vmatpush1.xpose.msra.mxu0 0.0
    %397 = vmatprep.subr.mxu0 0.0
    %398 = vmatpush1.xpose.msra.mxu0 0.0
    %399 = vmatprep.subr.mxu0 0.0
    %400 = vmatpush1.xpose.msra.mxu0 0.0
    %401 = vmatprep.subr.mxu0 0.0
    %402 = vmatpush1.xpose.msra.mxu0 0.0
    %403 = vmatprep.subr.mxu0 0.0
    %404 = vmatpush1.xpose.msra.mxu0 0.0
    %405 = vmatprep.subr.mxu0 0.0
    %406 = vmatpush1.xpose.msra.mxu0 0.0
    %407 = vmatprep.subr.mxu0 0.0
    %408 = vmatpush1.xpose.msra.mxu0 0.0
    %409 = vmatprep.subr.mxu0 0.0
    %410 = vmatpush1.xpose.msra.mxu0 0.0
    %411 = vmatprep.subr.mxu0 0.0
    %412 = vmatpush1.xpose.msra.mxu0 0.0
    %413 = vmatprep.subr.mxu0 0.0
    %414 = vmatpush1.xpose.msra.mxu0 0.0
    %415 = vmatprep.subr.mxu0 0.0
    %416 = vmatpush1.xpose.msra.mxu0 0.0
    %417 = vmatprep.subr.mxu0 0.0
    %418 = vmatpush1.xpose.msra.mxu0 0.0
    %419 = vmatprep.subr.mxu0 0.0
    %420 = vmatpush1.xpose.msra.mxu0 0.0
    %421 = vmatprep.subr.mxu0 0.0
    %422 = vmatpush1.xpose.msra.mxu0 0.0
    %423 = vmatprep.subr.mxu0 0.0
    %424 = vmatpush1.xpose.msra.mxu0 0.0
    %425 = vmatprep.subr.mxu0 0.0
    %426 = vmatpush1.xpose.msra.mxu0 0.0
    %427 = vmatprep.subr.mxu0 0.0
    %428 = vmatpush1.xpose.msra.mxu0 0.0
    %429 = vmatprep.subr.mxu0 0.0
    %430 = vmatpush1.xpose.msra.mxu0 0.0
    %431 = vmatprep.subr.mxu0 0.0
    %432 = vmatpush1.xpose.msra.mxu0 0.0
    %433 = vmatprep.subr.mxu0 0.0
    %434 = vmatpush1.xpose.msra.mxu0 0.0
    %435 = vmatprep.subr.mxu0 0.0
    %436 = vmatpush1.xpose.msra.mxu0 0.0
    %437 = vmatprep.mubr.f32.mxu0 0.0
    %v438 = vand.u32 %v65, 4294901760
    %439 = vmatmul.mubr.f32.gmra.mrb[0].mxu0 %v438
    %v440 = vpop.f32.mrb[0].mxu0
    %v441 = vadd.f32 %v367, %v440
    %v442 = vpop.f32.mrb[0].mxu0
    %443 = vdwg.mxu0
    %444 = vmatprep.subr.mxu0 0.0
    %v445 = vand.u32 %v68, 4294901760
    %446 = vmatpush1.xpose.msra.mxu0 %v445
    %447 = vmatprep.subr.mxu0 0.0
    %448 = vmatpush1.xpose.msra.mxu0 0.0
    %449 = vmatprep.subr.mxu0 0.0
    %450 = vmatpush1.xpose.msra.mxu0 0.0
    %451 = vmatprep.subr.mxu0 0.0
    %452 = vmatpush1.xpose.msra.mxu0 0.0
    %453 = vmatprep.subr.mxu0 0.0
    %454 = vmatpush1.xpose.msra.mxu0 0.0
    %455 = vmatprep.subr.mxu0 0.0
    %456 = vmatpush1.xpose.msra.mxu0 0.0
    %457 = vmatprep.subr.mxu0 0.0
    %458 = vmatpush1.xpose.msra.mxu0 0.0
    %459 = vmatprep.subr.mxu0 0.0
    %460 = vmatpush1.xpose.msra.mxu0 0.0
    %461 = vmatprep.subr.mxu0 0.0
    %462 = vmatpush1.xpose.msra.mxu0 0.0
    %463 = vmatprep.subr.mxu0 0.0
    %464 = vmatpush1.xpose.msra.mxu0 0.0
    %465 = vmatprep.subr.mxu0 0.0
    %466 = vmatpush1.xpose.msra.mxu0 0.0
    %467 = vmatprep.subr.mxu0 0.0
    %468 = vmatpush1.xpose.msra.mxu0 0.0
    %469 = vmatprep.subr.mxu0 0.0
    %470 = vmatpush1.xpose.msra.mxu0 0.0
    %471 = vmatprep.subr.mxu0 0.0
    %472 = vmatpush1.xpose.msra.mxu0 0.0
    %473 = vmatprep.subr.mxu0 0.0
    %474 = vmatpush1.xpose.msra.mxu0 0.0
    %475 = vmatprep.subr.mxu0 0.0
    %476 = vmatpush1.xpose.msra.mxu0 0.0
    %477 = vmatprep.subr.mxu0 0.0
    %478 = vmatpush1.xpose.msra.mxu0 0.0
    %479 = vmatprep.subr.mxu0 0.0
    %480 = vmatpush1.xpose.msra.mxu0 0.0
    %481 = vmatprep.subr.mxu0 0.0
    %482 = vmatpush1.xpose.msra.mxu0 0.0
    %483 = vmatprep.subr.mxu0 0.0
    %484 = vmatpush1.xpose.msra.mxu0 0.0
    %485 = vmatprep.subr.mxu0 0.0
    %486 = vmatpush1.xpose.msra.mxu0 0.0
    %487 = vmatprep.subr.mxu0 0.0
    %488 = vmatpush1.xpose.msra.mxu0 0.0
    %489 = vmatprep.subr.mxu0 0.0
    %490 = vmatpush1.xpose.msra.mxu0 0.0
    %491 = vmatprep.subr.mxu0 0.0
    %492 = vmatpush1.xpose.msra.mxu0 0.0
    %493 = vmatprep.subr.mxu0 0.0
    %494 = vmatpush1.xpose.msra.mxu0 0.0
    %495 = vmatprep.subr.mxu0 0.0
    %496 = vmatpush1.xpose.msra.mxu0 0.0
    %497 = vmatprep.subr.mxu0 0.0
    %498 = vmatpush1.xpose.msra.mxu0 0.0
    %499 = vmatprep.subr.mxu0 0.0
    %500 = vmatpush1.xpose.msra.mxu0 0.0
    %501 = vmatprep.subr.mxu0 0.0
    %502 = vmatpush1.xpose.msra.mxu0 0.0
    %503 = vmatprep.subr.mxu0 0.0
    %504 = vmatpush1.xpose.msra.mxu0 0.0
    %505 = vmatprep.subr.mxu0 0.0
    %506 = vmatpush1.xpose.msra.mxu0 0.0
    %507 = vmatprep.subr.mxu0 0.0
    %508 = vmatpush1.xpose.msra.mxu0 0.0
    %509 = vmatprep.mubr.f32.mxu0 0.0
    %v510 = vand.u32 %v65, 4294901760
    %511 = vmatmul.mubr.f32.gmra.mrb[0].mxu0 %v510
    %v512 = vpop.f32.mrb[0].mxu0
    %v513 = vadd.f32 %v441, %v512
    %v514 = vpop.f32.mrb[0].mxu0
    %515 = vdwg.mxu0
    %v517 = vsel %vm63, %v60, 0
    %v520 = vsel %vm63, %v62, 0
    %522 = vmatprep.subr.mxu0 0.0
    %v523 = vand.u32 %v520, 4294901760
    %524 = vmatpush1.xpose.msra.mxu0 %v523
    %525 = vmatprep.subr.mxu0 0.0
    %526 = vmatpush1.xpose.msra.mxu0 0.0
    %527 = vmatprep.subr.mxu0 0.0
    %528 = vmatpush1.xpose.msra.mxu0 0.0
    %529 = vmatprep.subr.mxu0 0.0
    %530 = vmatpush1.xpose.msra.mxu0 0.0
    %531 = vmatprep.subr.mxu0 0.0
    %532 = vmatpush1.xpose.msra.mxu0 0.0
    %533 = vmatprep.subr.mxu0 0.0
    %534 = vmatpush1.xpose.msra.mxu0 0.0
    %535 = vmatprep.subr.mxu0 0.0
    %536 = vmatpush1.xpose.msra.mxu0 0.0
    %537 = vmatprep.subr.mxu0 0.0
    %538 = vmatpush1.xpose.msra.mxu0 0.0
    %539 = vmatprep.subr.mxu0 0.0
    %540 = vmatpush1.xpose.msra.mxu0 0.0
    %541 = vmatprep.subr.mxu0 0.0
    %542 = vmatpush1.xpose.msra.mxu0 0.0
    %543 = vmatprep.subr.mxu0 0.0
    %544 = vmatpush1.xpose.msra.mxu0 0.0
    %545 = vmatprep.subr.mxu0 0.0
    %546 = vmatpush1.xpose.msra.mxu0 0.0
    %547 = vmatprep.subr.mxu0 0.0
    %548 = vmatpush1.xpose.msra.mxu0 0.0
    %549 = vmatprep.subr.mxu0 0.0
    %550 = vmatpush1.xpose.msra.mxu0 0.0
    %551 = vmatprep.subr.mxu0 0.0
    %552 = vmatpush1.xpose.msra.mxu0 0.0
    %553 = vmatprep.subr.mxu0 0.0
    %554 = vmatpush1.xpose.msra.mxu0 0.0
    %555 = vmatprep.subr.mxu0 0.0
    %556 = vmatpush1.xpose.msra.mxu0 0.0
    %557 = vmatprep.subr.mxu0 0.0
    %558 = vmatpush1.xpose.msra.mxu0 0.0
    %559 = vmatprep.subr.mxu0 0.0
    %560 = vmatpush1.xpose.msra.mxu0 0.0
    %561 = vmatprep.subr.mxu0 0.0
    %562 = vmatpush1.xpose.msra.mxu0 0.0
    %563 = vmatprep.subr.mxu0 0.0
    %564 = vmatpush1.xpose.msra.mxu0 0.0
    %565 = vmatprep.subr.mxu0 0.0
    %566 = vmatpush1.xpose.msra.mxu0 0.0
    %567 = vmatprep.subr.mxu0 0.0
    %568 = vmatpush1.xpose.msra.mxu0 0.0
    %569 = vmatprep.subr.mxu0 0.0
    %570 = vmatpush1.xpose.msra.mxu0 0.0
    %571 = vmatprep.subr.mxu0 0.0
    %572 = vmatpush1.xpose.msra.mxu0 0.0
    %573 = vmatprep.subr.mxu0 0.0
    %574 = vmatpush1.xpose.msra.mxu0 0.0
    %575 = vmatprep.subr.mxu0 0.0
    %576 = vmatpush1.xpose.msra.mxu0 0.0
    %577 = vmatprep.subr.mxu0 0.0
    %578 = vmatpush1.xpose.msra.mxu0 0.0
    %579 = vmatprep.subr.mxu0 0.0
    %580 = vmatpush1.xpose.msra.mxu0 0.0
    %581 = vmatprep.subr.mxu0 0.0
    %582 = vmatpush1.xpose.msra.mxu0 0.0
    %583 = vmatprep.subr.mxu0 0.0
    %584 = vmatpush1.xpose.msra.mxu0 0.0
    %585 = vmatprep.subr.mxu0 0.0
    %586 = vmatpush1.xpose.msra.mxu0 0.0
    %587 = vmatprep.mubr.f32.mxu0 0.0
    %v588 = vand.u32 %v517, 4294901760
    %v589 = vsub.f32 %v517, %v588
    %v590 = vand.u32 %v589, 4294901760
    %v591 = vsub.f32 %v589, %v590
    %v592 = vand.u32 %v591, 4294901760
    %593 = vmatmul.mubr.f32.gmra.mrb[0].mxu0 %v592
    %v594 = vpop.f32.mrb[0].mxu0
    %v595 = vadd.f32 0.0, %v594
    %v596 = vpop.f32.mrb[0].mxu0
    %597 = vdwg.mxu0
    %598 = vmatprep.subr.mxu0 0.0
    %v599 = vand.u32 %v520, 4294901760
    %v600 = vsub.f32 %v520, %v599
    %v601 = vand.u32 %v600, 4294901760
    %v602 = vsub.f32 %v600, %v601
    %v603 = vand.u32 %v602, 4294901760
    %604 = vmatpush1.xpose.msra.mxu0 %v603
    %605 = vmatprep.subr.mxu0 0.0
    %606 = vmatpush1.xpose.msra.mxu0 0.0
    %607 = vmatprep.subr.mxu0 0.0
    %608 = vmatpush1.xpose.msra.mxu0 0.0
    %609 = vmatprep.subr.mxu0 0.0
    %610 = vmatpush1.xpose.msra.mxu0 0.0
    %611 = vmatprep.subr.mxu0 0.0
    %612 = vmatpush1.xpose.msra.mxu0 0.0
    %613 = vmatprep.subr.mxu0 0.0
    %614 = vmatpush1.xpose.msra.mxu0 0.0
    %615 = vmatprep.subr.mxu0 0.0
    %616 = vmatpush1.xpose.msra.mxu0 0.0
    %617 = vmatprep.subr.mxu0 0.0
    %618 = vmatpush1.xpose.msra.mxu0 0.0
    %619 = vmatprep.subr.mxu0 0.0
    %620 = vmatpush1.xpose.msra.mxu0 0.0
    %621 = vmatprep.subr.mxu0 0.0
    %622 = vmatpush1.xpose.msra.mxu0 0.0
    %623 = vmatprep.subr.mxu0 0.0
    %624 = vmatpush1.xpose.msra.mxu0 0.0
    %625 = vmatprep.subr.mxu0 0.0
    %626 = vmatpush1.xpose.msra.mxu0 0.0
    %627 = vmatprep.subr.mxu0 0.0
    %628 = vmatpush1.xpose.msra.mxu0 0.0
    %629 = vmatprep.subr.mxu0 0.0
    %630 = vmatpush1.xpose.msra.mxu0 0.0
    %631 = vmatprep.subr.mxu0 0.0
    %632 = vmatpush1.xpose.msra.mxu0 0.0
    %633 = vmatprep.subr.mxu0 0.0
    %634 = vmatpush1.xpose.msra.mxu0 0.0
    %635 = vmatprep.subr.mxu0 0.0
    %636 = vmatpush1.xpose.msra.mxu0 0.0
    %637 = vmatprep.subr.mxu0 0.0
    %638 = vmatpush1.xpose.msra.mxu0 0.0
    %639 = vmatprep.subr.mxu0 0.0
    %640 = vmatpush1.xpose.msra.mxu0 0.0
    %641 = vmatprep.subr.mxu0 0.0
    %642 = vmatpush1.xpose.msra.mxu0 0.0
    %643 = vmatprep.subr.mxu0 0.0
    %644 = vmatpush1.xpose.msra.mxu0 0.0
    %645 = vmatprep.subr.mxu0 0.0
    %646 = vmatpush1.xpose.msra.mxu0 0.0
    %647 = vmatprep.subr.mxu0 0.0
    %648 = vmatpush1.xpose.msra.mxu0 0.0
    %649 = vmatprep.subr.mxu0 0.0
    %650 = vmatpush1.xpose.msra.mxu0 0.0
    %651 = vmatprep.subr.mxu0 0.0
    %652 = vmatpush1.xpose.msra.mxu0 0.0
    %653 = vmatprep.subr.mxu0 0.0
    %654 = vmatpush1.xpose.msra.mxu0 0.0
    %655 = vmatprep.subr.mxu0 0.0
    %656 = vmatpush1.xpose.msra.mxu0 0.0
    %657 = vmatprep.subr.mxu0 0.0
    %658 = vmatpush1.xpose.msra.mxu0 0.0
    %659 = vmatprep.subr.mxu0 0.0
    %660 = vmatpush1.xpose.msra.mxu0 0.0
    %661 = vmatprep.subr.mxu0 0.0
    %662 = vmatpush1.xpose.msra.mxu0 0.0
    %663 = vmatprep.subr.mxu0 0.0
    %664 = vmatpush1.xpose.msra.mxu0 0.0
    %665 = vmatprep.subr.mxu0 0.0
    %666 = vmatpush1.xpose.msra.mxu0 0.0
    %667 = vmatprep.mubr.f32.mxu0 0.0
    %v668 = vand.u32 %v517, 4294901760
    %669 = vmatmul.mubr.f32.gmra.mrb[0].mxu0 %v668
    %v670 = vpop.f32.mrb[0].mxu0
    %v671 = vadd.f32 %v595, %v670
    %v672 = vpop.f32.mrb[0].mxu0
    %673 = vdwg.mxu0
    %674 = vmatprep.subr.mxu0 0.0
    %v675 = vand.u32 %v520, 4294901760
    %v676 = vsub.f32 %v520, %v675
    %677 = vmatpush1.xpose.msra.mxu0 %v676
    %678 = vmatprep.subr.mxu0 0.0
    %679 = vmatpush1.xpose.msra.mxu0 0.0
    %680 = vmatprep.subr.mxu0 0.0
    %681 = vmatpush1.xpose.msra.mxu0 0.0
    %682 = vmatprep.subr.mxu0 0.0
    %683 = vmatpush1.xpose.msra.mxu0 0.0
    %684 = vmatprep.subr.mxu0 0.0
    %685 = vmatpush1.xpose.msra.mxu0 0.0
    %686 = vmatprep.subr.mxu0 0.0
    %687 = vmatpush1.xpose.msra.mxu0 0.0
    %688 = vmatprep.subr.mxu0 0.0
    %689 = vmatpush1.xpose.msra.mxu0 0.0
    %690 = vmatprep.subr.mxu0 0.0
    %691 = vmatpush1.xpose.msra.mxu0 0.0
    %692 = vmatprep.subr.mxu0 0.0
    %693 = vmatpush1.xpose.msra.mxu0 0.0
    %694 = vmatprep.subr.mxu0 0.0
    %695 = vmatpush1.xpose.msra.mxu0 0.0
    %696 = vmatprep.subr.mxu0 0.0
    %697 = vmatpush1.xpose.msra.mxu0 0.0
    %698 = vmatprep.subr.mxu0 0.0
    %699 = vmatpush1.xpose.msra.mxu0 0.0
    %700 = vmatprep.subr.mxu0 0.0
    %701 = vmatpush1.xpose.msra.mxu0 0.0
    %702 = vmatprep.subr.mxu0 0.0
    %703 = vmatpush1.xpose.msra.mxu0 0.0
    %704 = vmatprep.subr.mxu0 0.0
    %705 = vmatpush1.xpose.msra.mxu0 0.0
    %706 = vmatprep.subr.mxu0 0.0
    %707 = vmatpush1.xpose.msra.mxu0 0.0
    %708 = vmatprep.subr.mxu0 0.0
    %709 = vmatpush1.xpose.msra.mxu0 0.0
    %710 = vmatprep.subr.mxu0 0.0
    %711 = vmatpush1.xpose.msra.mxu0 0.0
    %712 = vmatprep.subr.mxu0 0.0
    %713 = vmatpush1.xpose.msra.mxu0 0.0
    %714 = vmatprep.subr.mxu0 0.0
    %715 = vmatpush1.xpose.msra.mxu0 0.0
    %716 = vmatprep.subr.mxu0 0.0
    %717 = vmatpush1.xpose.msra.mxu0 0.0
    %718 = vmatprep.subr.mxu0 0.0
    %719 = vmatpush1.xpose.msra.mxu0 0.0
    %720 = vmatprep.subr.mxu0 0.0
    %721 = vmatpush1.xpose.msra.mxu0 0.0
    %722 = vmatprep.subr.mxu0 0.0
    %723 = vmatpush1.xpose.msra.mxu0 0.0
    %724 = vmatprep.subr.mxu0 0.0
    %725 = vmatpush1.xpose.msra.mxu0 0.0
    %726 = vmatprep.subr.mxu0 0.0
    %727 = vmatpush1.xpose.msra.mxu0 0.0
    %728 = vmatprep.subr.mxu0 0.0
    %729 = vmatpush1.xpose.msra.mxu0 0.0
    %730 = vmatprep.subr.mxu0 0.0
    %731 = vmatpush1.xpose.msra.mxu0 0.0
    %732 = vmatprep.subr.mxu0 0.0
    %733 = vmatpush1.xpose.msra.mxu0 0.0
    %734 = vmatprep.subr.mxu0 0.0
    %735 = vmatpush1.xpose.msra.mxu0 0.0
    %736 = vmatprep.subr.mxu0 0.0
    %737 = vmatpush1.xpose.msra.mxu0 0.0
    %738 = vmatprep.subr.mxu0 0.0
    %739 = vmatpush1.xpose.msra.mxu0 0.0
    %740 = vmatprep.mubr.f32.mxu0 0.0
    %v741 = vand.u32 %v517, 4294901760
    %v742 = vsub.f32 %v517, %v741
    %743 = vmatmul.mubr.f32.gmra.mrb[0].mxu0 %v742
    %v744 = vpop.f32.mrb[0].mxu0
    %v745 = vadd.f32 %v671, %v744
    %v746 = vpop.f32.mrb[0].mxu0
    %747 = vdwg.mxu0
    %748 = vmatprep.subr.mxu0 0.0
    %v749 = vand.u32 %v520, 4294901760
    %750 = vmatpush1.xpose.msra.mxu0 %v749
    %751 = vmatprep.subr.mxu0 0.0
    %752 = vmatpush1.xpose.msra.mxu0 0.0
    %753 = vmatprep.subr.mxu0 0.0
    %754 = vmatpush1.xpose.msra.mxu0 0.0
    %755 = vmatprep.subr.mxu0 0.0
    %756 = vmatpush1.xpose.msra.mxu0 0.0
    %757 = vmatprep.subr.mxu0 0.0
    %758 = vmatpush1.xpose.msra.mxu0 0.0
    %759 = vmatprep.subr.mxu0 0.0
    %760 = vmatpush1.xpose.msra.mxu0 0.0
    %761 = vmatprep.subr.mxu0 0.0
    %762 = vmatpush1.xpose.msra.mxu0 0.0
    %763 = vmatprep.subr.mxu0 0.0
    %764 = vmatpush1.xpose.msra.mxu0 0.0
    %765 = vmatprep.subr.mxu0 0.0
    %766 = vmatpush1.xpose.msra.mxu0 0.0
    %767 = vmatprep.subr.mxu0 0.0
    %768 = vmatpush1.xpose.msra.mxu0 0.0
    %769 = vmatprep.subr.mxu0 0.0
    %770 = vmatpush1.xpose.msra.mxu0 0.0
    %771 = vmatprep.subr.mxu0 0.0
    %772 = vmatpush1.xpose.msra.mxu0 0.0
    %773 = vmatprep.subr.mxu0 0.0
    %774 = vmatpush1.xpose.msra.mxu0 0.0
    %775 = vmatprep.subr.mxu0 0.0
    %776 = vmatpush1.xpose.msra.mxu0 0.0
    %777 = vmatprep.subr.mxu0 0.0
    %778 = vmatpush1.xpose.msra.mxu0 0.0
    %779 = vmatprep.subr.mxu0 0.0
    %780 = vmatpush1.xpose.msra.mxu0 0.0
    %781 = vmatprep.subr.mxu0 0.0
    %782 = vmatpush1.xpose.msra.mxu0 0.0
    %783 = vmatprep.subr.mxu0 0.0
    %784 = vmatpush1.xpose.msra.mxu0 0.0
    %785 = vmatprep.subr.mxu0 0.0
    %786 = vmatpush1.xpose.msra.mxu0 0.0
    %787 = vmatprep.subr.mxu0 0.0
    %788 = vmatpush1.xpose.msra.mxu0 0.0
    %789 = vmatprep.subr.mxu0 0.0
    %790 = vmatpush1.xpose.msra.mxu0 0.0
    %791 = vmatprep.subr.mxu0 0.0
    %792 = vmatpush1.xpose.msra.mxu0 0.0
    %793 = vmatprep.subr.mxu0 0.0
    %794 = vmatpush1.xpose.msra.mxu0 0.0
    %795 = vmatprep.subr.mxu0 0.0
    %796 = vmatpush1.xpose.msra.mxu0 0.0
    %797 = vmatprep.subr.mxu0 0.0
    %798 = vmatpush1.xpose.msra.mxu0 0.0
    %799 = vmatprep.subr.mxu0 0.0
    %800 = vmatpush1.xpose.msra.mxu0 0.0
    %801 = vmatprep.subr.mxu0 0.0
    %802 = vmatpush1.xpose.msra.mxu0 0.0
    %803 = vmatprep.subr.mxu0 0.0
    %804 = vmatpush1.xpose.msra.mxu0 0.0
    %805 = vmatprep.subr.mxu0 0.0
    %806 = vmatpush1.xpose.msra.mxu0 0.0
    %807 = vmatprep.subr.mxu0 0.0
    %808 = vmatpush1.xpose.msra.mxu0 0.0
    %809 = vmatprep.subr.mxu0 0.0
    %810 = vmatpush1.xpose.msra.mxu0 0.0
    %811 = vmatprep.subr.mxu0 0.0
    %812 = vmatpush1.xpose.msra.mxu0 0.0
    %813 = vmatprep.mubr.f32.mxu0 0.0
    %v814 = vand.u32 %v517, 4294901760
    %v815 = vsub.f32 %v517, %v814
    %v816 = vand.u32 %v815, 4294901760
    %817 = vmatmul.mubr.f32.gmra.mrb[0].mxu0 %v816
    %v818 = vpop.f32.mrb[0].mxu0
    %v819 = vadd.f32 %v745, %v818
    %v820 = vpop.f32.mrb[0].mxu0
    %821 = vdwg.mxu0
    %822 = vmatprep.subr.mxu0 0.0
    %v823 = vand.u32 %v520, 4294901760
    %v824 = vsub.f32 %v520, %v823
    %v825 = vand.u32 %v824, 4294901760
    %826 = vmatpush1.xpose.msra.mxu0 %v825
    %827 = vmatprep.subr.mxu0 0.0
    %828 = vmatpush1.xpose.msra.mxu0 0.0
    %829 = vmatprep.subr.mxu0 0.0
    %830 = vmatpush1.xpose.msra.mxu0 0.0
    %831 = vmatprep.subr.mxu0 0.0
    %832 = vmatpush1.xpose.msra.mxu0 0.0
    %833 = vmatprep.subr.mxu0 0.0
    %834 = vmatpush1.xpose.msra.mxu0 0.0
    %835 = vmatprep.subr.mxu0 0.0
    %836 = vmatpush1.xpose.msra.mxu0 0.0
    %837 = vmatprep.subr.mxu0 0.0
    %838 = vmatpush1.xpose.msra.mxu0 0.0
    %839 = vmatprep.subr.mxu0 0.0
    %840 = vmatpush1.xpose.msra.mxu0 0.0
    %841 = vmatprep.subr.mxu0 0.0
    %842 = vmatpush1.xpose.msra.mxu0 0.0
    %843 = vmatprep.subr.mxu0 0.0
    %844 = vmatpush1.xpose.msra.mxu0 0.0
    %845 = vmatprep.subr.mxu0 0.0
    %846 = vmatpush1.xpose.msra.mxu0 0.0
    %847 = vmatprep.subr.mxu0 0.0
    %848 = vmatpush1.xpose.msra.mxu0 0.0
    %849 = vmatprep.subr.mxu0 0.0
    %850 = vmatpush1.xpose.msra.mxu0 0.0
    %851 = vmatprep.subr.mxu0 0.0
    %852 = vmatpush1.xpose.msra.mxu0 0.0
    %853 = vmatprep.subr.mxu0 0.0
    %854 = vmatpush1.xpose.msra.mxu0 0.0
    %855 = vmatprep.subr.mxu0 0.0
    %856 = vmatpush1.xpose.msra.mxu0 0.0
    %857 = vmatprep.subr.mxu0 0.0
    %858 = vmatpush1.xpose.msra.mxu0 0.0
    %859 = vmatprep.subr.mxu0 0.0
    %860 = vmatpush1.xpose.msra.mxu0 0.0
    %861 = vmatprep.subr.mxu0 0.0
    %862 = vmatpush1.xpose.msra.mxu0 0.0
    %863 = vmatprep.subr.mxu0 0.0
    %864 = vmatpush1.xpose.msra.mxu0 0.0
    %865 = vmatprep.subr.mxu0 0.0
    %866 = vmatpush1.xpose.msra.mxu0 0.0
    %867 = vmatprep.subr.mxu0 0.0
    %868 = vmatpush1.xpose.msra.mxu0 0.0
    %869 = vmatprep.subr.mxu0 0.0
    %870 = vmatpush1.xpose.msra.mxu0 0.0
    %871 = vmatprep.subr.mxu0 0.0
    %872 = vmatpush1.xpose.msra.mxu0 0.0
    %873 = vmatprep.subr.mxu0 0.0
    %874 = vmatpush1.xpose.msra.mxu0 0.0
    %875 = vmatprep.subr.mxu0 0.0
    %876 = vmatpush1.xpose.msra.mxu0 0.0
    %877 = vmatprep.subr.mxu0 0.0
    %878 = vmatpush1.xpose.msra.mxu0 0.0
    %879 = vmatprep.subr.mxu0 0.0
    %880 = vmatpush1.xpose.msra.mxu0 0.0
    %881 = vmatprep.subr.mxu0 0.0
    %882 = vmatpush1.xpose.msra.mxu0 0.0
    %883 = vmatprep.subr.mxu0 0.0
    %884 = vmatpush1.xpose.msra.mxu0 0.0
    %885 = vmatprep.subr.mxu0 0.0
    %886 = vmatpush1.xpose.msra.mxu0 0.0
    %887 = vmatprep.subr.mxu0 0.0
    %888 = vmatpush1.xpose.msra.mxu0 0.0
    %889 = vmatprep.mubr.f32.mxu0 0.0
    %v890 = vand.u32 %v517, 4294901760
    %891 = vmatmul.mubr.f32.gmra.mrb[0].mxu0 %v890
    %v892 = vpop.f32.mrb[0].mxu0
    %v893 = vadd.f32 %v819, %v892
    %v894 = vpop.f32.mrb[0].mxu0
    %895 = vdwg.mxu0
    %896 = vmatprep.subr.mxu0 0.0
    %v897 = vand.u32 %v520, 4294901760
    %898 = vmatpush1.xpose.msra.mxu0 %v897
    %899 = vmatprep.subr.mxu0 0.0
    %900 = vmatpush1.xpose.msra.mxu0 0.0
    %901 = vmatprep.subr.mxu0 0.0
    %902 = vmatpush1.xpose.msra.mxu0 0.0
    %903 = vmatprep.subr.mxu0 0.0
    %904 = vmatpush1.xpose.msra.mxu0 0.0
    %905 = vmatprep.subr.mxu0 0.0
    %906 = vmatpush1.xpose.msra.mxu0 0.0
    %907 = vmatprep.subr.mxu0 0.0
    %908 = vmatpush1.xpose.msra.mxu0 0.0
    %909 = vmatprep.subr.mxu0 0.0
    %910 = vmatpush1.xpose.msra.mxu0 0.0
    %911 = vmatprep.subr.mxu0 0.0
    %912 = vmatpush1.xpose.msra.mxu0 0.0
    %913 = vmatprep.subr.mxu0 0.0
    %914 = vmatpush1.xpose.msra.mxu0 0.0
    %915 = vmatprep.subr.mxu0 0.0
    %916 = vmatpush1.xpose.msra.mxu0 0.0
    %917 = vmatprep.subr.mxu0 0.0
    %918 = vmatpush1.xpose.msra.mxu0 0.0
    %919 = vmatprep.subr.mxu0 0.0
    %920 = vmatpush1.xpose.msra.mxu0 0.0
    %921 = vmatprep.subr.mxu0 0.0
    %922 = vmatpush1.xpose.msra.mxu0 0.0
    %923 = vmatprep.subr.mxu0 0.0
    %924 = vmatpush1.xpose.msra.mxu0 0.0
    %925 = vmatprep.subr.mxu0 0.0
    %926 = vmatpush1.xpose.msra.mxu0 0.0
    %927 = vmatprep.subr.mxu0 0.0
    %928 = vmatpush1.xpose.msra.mxu0 0.0
    %929 = vmatprep.subr.mxu0 0.0
    %930 = vmatpush1.xpose.msra.mxu0 0.0
    %931 = vmatprep.subr.mxu0 0.0
    %932 = vmatpush1.xpose.msra.mxu0 0.0
    %933 = vmatprep.subr.mxu0 0.0
    %934 = vmatpush1.xpose.msra.mxu0 0.0
    %935 = vmatprep.subr.mxu0 0.0
    %936 = vmatpush1.xpose.msra.mxu0 0.0
    %937 = vmatprep.subr.mxu0 0.0
    %938 = vmatpush1.xpose.msra.mxu0 0.0
    %939 = vmatprep.subr.mxu0 0.0
    %940 = vmatpush1.xpose.msra.mxu0 0.0
    %941 = vmatprep.subr.mxu0 0.0
    %942 = vmatpush1.xpose.msra.mxu0 0.0
    %943 = vmatprep.subr.mxu0 0.0
    %944 = vmatpush1.xpose.msra.mxu0 0.0
    %945 = vmatprep.subr.mxu0 0.0
    %946 = vmatpush1.xpose.msra.mxu0 0.0
    %947 = vmatprep.subr.mxu0 0.0
    %948 = vmatpush1.xpose.msra.mxu0 0.0
    %949 = vmatprep.subr.mxu0 0.0
    %950 = vmatpush1.xpose.msra.mxu0 0.0
    %951 = vmatprep.subr.mxu0 0.0
    %952 = vmatpush1.xpose.msra.mxu0 0.0
    %953 = vmatprep.subr.mxu0 0.0
    %954 = vmatpush1.xpose.msra.mxu0 0.0
    %955 = vmatprep.subr.mxu0 0.0
    %956 = vmatpush1.xpose.msra.mxu0 0.0
    %957 = vmatprep.subr.mxu0 0.0
    %958 = vmatpush1.xpose.msra.mxu0 0.0
    %959 = vmatprep.subr.mxu0 0.0
    %960 = vmatpush1.xpose.msra.mxu0 0.0
    %961 = vmatprep.mubr.f32.mxu0 0.0
    %v962 = vand.u32 %v517, 4294901760
    %963 = vmatmul.mubr.f32.gmra.mrb[0].mxu0 %v962
    %v964 = vpop.f32.mrb[0].mxu0
    %v965 = vadd.f32 %v893, %v964
    %v966 = vpop.f32.mrb[0].mxu0
    %967 = vdwg.mxu0
    %v968 = vmul.f32 %v513, 0.17677669
    %v969 = vmul.f32 %v965, 0.17677669
    %vm970 = vcmask 64512
    %v971 = vsel %vm970, %v968, -inf
    %972 = vmax.xlane.f32.xlu0 %v971
    %v973 = vpop.xlane.xlu0 %972
    %v974 = vsel %vm970, %v969, -inf
    %975 = vmax.xlane.f32.xlu0 %v974
    %v976 = vpop.xlane.xlu0 %975
    %v977 = vsub.f32 %v968, %v973
    %v978 = vsub.f32 %v969, %v976
    %v979 = vmul.f32 %v977, 1.442695
    %v980 = vpow.pop %v979
    %v981 = vmul.f32 %v978, 1.442695
    %v982 = vpow.pop %v981
    %v983 = vsel %vm970, %v980, 0.0
    %984 = vadd.xlane.f32.xlu0 %v983
    %v985 = vpop.xlane.xlu0 %984
    %v986 = vsel %vm970, %v982, 0.0
    %987 = vadd.xlane.f32.xlu0 %v986
    %v988 = vpop.xlane.xlu0 %987
    %v989 = vsel %vm970, %v980, -inf
    %990 = vmax.xlane.f32.xlu0 %v989
    %v991 = vpop.xlane.xlu0 %990
    %v992 = vsel %vm970, %v982, -inf
    %993 = vmax.xlane.f32.xlu0 %v992
    %v994 = vpop.xlane.xlu0 %993
    %vm995 = vcmp.ge.f32.partialorder %v980, %v991
    %vm996 = vcmp.ge.f32.partialorder %v982, %v994
    %v997 = vsel %vm995, -1.0, %v980
    %v998 = vsel %vm996, -1.0, %v982
    %v999 = vsel %vm970, %v997, -inf
    %1000 = vmax.xlane.f32.xlu0 %v999
    %v1001 = vpop.xlane.xlu0 %1000
    %v1002 = vsel %vm970, %v998, -inf
    %1003 = vmax.xlane.f32.xlu0 %v1002
    %v1004 = vpop.xlane.xlu0 %1003
    %vm1005 = vcmp.ge.f32.partialorder %v997, %v1001
    %vm1006 = vcmp.ge.f32.partialorder %v998, %v1004
    %v1007 = vsel %vm1005, -1.0, %v997
    %v1008 = vsel %vm1006, -1.0, %v998
    %v1009 = vsel %vm970, %v1007, -inf
    %1010 = vmax.xlane.f32.xlu0 %v1009
    %v1011 = vpop.xlane.xlu0 %1010
    %v1012 = vsel %vm970, %v1008, -inf
    %1013 = vmax.xlane.f32.xlu0 %v1012
    %v1014 = vpop.xlane.xlu0 %1013
    %vm1015 = vcmp.ge.f32.partialorder %v1007, %v1011
    %vm1016 = vcmp.ge.f32.partialorder %v1008, %v1014
    %v1017 = vsel %vm1015, -1.0, %v1007
    %v1018 = vsel %vm1016, -1.0, %v1008
    %v1019 = vsel %vm970, %v1017, -inf
    %1020 = vmax.xlane.f32.xlu0 %v1019
    %v1021 = vpop.xlane.xlu0 %1020
    %v1022 = vsel %vm970, %v1018, -inf
    %1023 = vmax.xlane.f32.xlu0 %v1022
    %v1024 = vpop.xlane.xlu0 %1023
    %v1025 = vmul.f32 %v985, 1e-07
    %v1026 = vmul.f32 %v988, 1e-07
    %v1027 = vadd.f32 %v1021, %v1025
    %v1028 = vadd.f32 %v1024, %v1026
    %v1029 = vsub.f32 %v980, %v1027
    %v1030 = vsub.f32 %v982, %v1028
    %v1031 = vmax.f32 %v1029, 0.0
    %v1032 = vmax.f32 %v1030, 0.0
    %v1033 = vsel %vm970, %v1031, 0.0
    %1034 = vadd.xlane.f32.xlu0 %v1033
    %v1035 = vpop.xlane.xlu0 %1034
    %v1036 = vsel %vm970, %v1032, 0.0
    %1037 = vadd.xlane.f32.xlu0 %v1036
    %v1038 = vpop.xlane.xlu0 %1037
    %v1039 = vadd.f32 %v1035, %v1025
    %v1040 = vadd.f32 %v1038, %v1026
    %v1041 = vrcp.pop %v1039
    %v1042 = vmul.f32 1.0, %v1041
    %v1043 = vrcp.pop %v1040
    %v1044 = vmul.f32 1.0, %v1043
    %v1045 = vmul.f32 %v1031, %v1042
    %v1046 = vmul.f32 %v1032, %v1044
    %v1047 = vld [vmem:[#allocation7] sm:$0xff]
    %v1048 = vld [vmem:[#allocation7 + $0x8] sm:$0xff]
    %v1050 = vsel %vm970, %v1045, 0
    %1052 = vmatprep.subr.mxu0 0.0
    %v1053 = vand.u32 %v1047, 4294901760
    %1054 = vmatpush1.msra.mxu0 %v1053
    %1055 = vmatprep.subr.mxu0 0.0
    %1056 = vmatpush1.msra.mxu0 0.0
    %1057 = vmatprep.subr.mxu0 0.0
    %1058 = vmatpush1.msra.mxu0 0.0
    %1059 = vmatprep.subr.mxu0 0.0
    %1060 = vmatpush1.msra.mxu0 0.0
    %1061 = vmatprep.subr.mxu0 0.0
    %1062 = vmatpush1.msra.mxu0 0.0
    %1063 = vmatprep.subr.mxu0 0.0
    %1064 = vmatpush1.msra.mxu0 0.0
    %1065 = vmatprep.subr.mxu0 0.0
    %1066 = vmatpush1.msra.mxu0 0.0
    %1067 = vmatprep.subr.mxu0 0.0
    %1068 = vmatpush1.msra.mxu0 0.0
    %1069 = vmatprep.subr.mxu0 0.0
    %1070 = vmatpush1.msra.mxu0 0.0
    %1071 = vmatprep.subr.mxu0 0.0
    %1072 = vmatpush1.msra.mxu0 0.0
    %1073 = vmatprep.subr.mxu0 0.0
    %1074 = vmatpush1.msra.mxu0 0.0
    %1075 = vmatprep.subr.mxu0 0.0
    %1076 = vmatpush1.msra.mxu0 0.0
    %1077 = vmatprep.subr.mxu0 0.0
    %1078 = vmatpush1.msra.mxu0 0.0
    %1079 = vmatprep.subr.mxu0 0.0
    %1080 = vmatpush1.msra.mxu0 0.0
    %1081 = vmatprep.subr.mxu0 0.0
    %1082 = vmatpush1.msra.mxu0 0.0
    %1083 = vmatprep.subr.mxu0 0.0
    %1084 = vmatpush1.msra.mxu0 0.0
    %1085 = vmatprep.subr.mxu0 0.0
    %1086 = vmatpush1.msra.mxu0 0.0
    %1087 = vmatprep.subr.mxu0 0.0
    %1088 = vmatpush1.msra.mxu0 0.0
    %1089 = vmatprep.subr.mxu0 0.0
    %1090 = vmatpush1.msra.mxu0 0.0
    %1091 = vmatprep.subr.mxu0 0.0
    %1092 = vmatpush1.msra.mxu0 0.0
    %1093 = vmatprep.subr.mxu0 0.0
    %1094 = vmatpush1.msra.mxu0 0.0
    %1095 = vmatprep.subr.mxu0 0.0
    %1096 = vmatpush1.msra.mxu0 0.0
    %1097 = vmatprep.subr.mxu0 0.0
    %1098 = vmatpush1.msra.mxu0 0.0
    %1099 = vmatprep.subr.mxu0 0.0
    %1100 = vmatpush1.msra.mxu0 0.0
    %1101 = vmatprep.subr.mxu0 0.0
    %1102 = vmatpush1.msra.mxu0 0.0
    %1103 = vmatprep.subr.mxu0 0.0
    %1104 = vmatpush1.msra.mxu0 0.0
    %1105 = vmatprep.subr.mxu0 0.0
    %1106 = vmatpush1.msra.mxu0 0.0
    %1107 = vmatprep.subr.mxu0 0.0
    %1108 = vmatpush1.msra.mxu0 0.0
    %1109 = vmatprep.subr.mxu0 0.0
    %1110 = vmatpush1.msra.mxu0 0.0
    %1111 = vmatprep.subr.mxu0 0.0
    %1112 = vmatpush1.msra.mxu0 0.0
    %1113 = vmatprep.subr.mxu0 0.0
    %1114 = vmatpush1.msra.mxu0 0.0
    %1115 = vmatprep.subr.mxu0 0.0
    %1116 = vmatpush1.msra.mxu0 0.0
    %1117 = vmatprep.mubr.f32.mxu0 0.0
    %v1118 = vand.u32 %v1050, 4294901760
    %v1119 = vsub.f32 %v1050, %v1118
    %v1120 = vand.u32 %v1119, 4294901760
    %v1121 = vsub.f32 %v1119, %v1120
    %v1122 = vand.u32 %v1121, 4294901760
    %1123 = vmatmul.mubr.f32.gmra.mrb[0].mxu0 %v1122
    %v1124 = vpop.f32.mrb[0].mxu0
    %v1125 = vadd.f32 0.0, %v1124
    %v1126 = vpop.f32.mrb[0].mxu0
    %1127 = vdwg.mxu0
    %1128 = vmatprep.subr.mxu0 0.0
    %v1129 = vand.u32 %v1047, 4294901760
    %v1130 = vsub.f32 %v1047, %v1129
    %v1131 = vand.u32 %v1130, 4294901760
    %v1132 = vsub.f32 %v1130, %v1131
    %v1133 = vand.u32 %v1132, 4294901760
    %1134 = vmatpush1.msra.mxu0 %v1133
    %1135 = vmatprep.subr.mxu0 0.0
    %1136 = vmatpush1.msra.mxu0 0.0
    %1137 = vmatprep.subr.mxu0 0.0
    %1138 = vmatpush1.msra.mxu0 0.0
    %1139 = vmatprep.subr.mxu0 0.0
    %1140 = vmatpush1.msra.mxu0 0.0
    %1141 = vmatprep.subr.mxu0 0.0
    %1142 = vmatpush1.msra.mxu0 0.0
    %1143 = vmatprep.subr.mxu0 0.0
    %1144 = vmatpush1.msra.mxu0 0.0
    %1145 = vmatprep.subr.mxu0 0.0
    %1146 = vmatpush1.msra.mxu0 0.0
    %1147 = vmatprep.subr.mxu0 0.0
    %1148 = vmatpush1.msra.mxu0 0.0
    %1149 = vmatprep.subr.mxu0 0.0
    %1150 = vmatpush1.msra.mxu0 0.0
    %1151 = vmatprep.subr.mxu0 0.0
    %1152 = vmatpush1.msra.mxu0 0.0
    %1153 = vmatprep.subr.mxu0 0.0
    %1154 = vmatpush1.msra.mxu0 0.0
    %1155 = vmatprep.subr.mxu0 0.0
    %1156 = vmatpush1.msra.mxu0 0.0
    %1157 = vmatprep.subr.mxu0 0.0
    %1158 = vmatpush1.msra.mxu0 0.0
    %1159 = vmatprep.subr.mxu0 0.0
    %1160 = vmatpush1.msra.mxu0 0.0
    %1161 = vmatprep.subr.mxu0 0.0
    %1162 = vmatpush1.msra.mxu0 0.0
    %1163 = vmatprep.subr.mxu0 0.0
    %1164 = vmatpush1.msra.mxu0 0.0
    %1165 = vmatprep.subr.mxu0 0.0
    %1166 = vmatpush1.msra.mxu0 0.0
    %1167 = vmatprep.subr.mxu0 0.0
    %1168 = vmatpush1.msra.mxu0 0.0
    %1169 = vmatprep.subr.mxu0 0.0
    %1170 = vmatpush1.msra.mxu0 0.0
    %1171 = vmatprep.subr.mxu0 0.0
    %1172 = vmatpush1.msra.mxu0 0.0
    %1173 = vmatprep.subr.mxu0 0.0
    %1174 = vmatpush1.msra.mxu0 0.0
    %1175 = vmatprep.subr.mxu0 0.0
    %1176 = vmatpush1.msra.mxu0 0.0
    %1177 = vmatprep.subr.mxu0 0.0
    %1178 = vmatpush1.msra.mxu0 0.0
    %1179 = vmatprep.subr.mxu0 0.0
    %1180 = vmatpush1.msra.mxu0 0.0
    %1181 = vmatprep.subr.mxu0 0.0
    %1182 = vmatpush1.msra.mxu0 0.0
    %1183 = vmatprep.subr.mxu0 0.0
    %1184 = vmatpush1.msra.mxu0 0.0
    %1185 = vmatprep.subr.mxu0 0.0
    %1186 = vmatpush1.msra.mxu0 0.0
    %1187 = vmatprep.subr.mxu0 0.0
    %1188 = vmatpush1.msra.mxu0 0.0
    %1189 = vmatprep.subr.mxu0 0.0
    %1190 = vmatpush1.msra.mxu0 0.0
    %1191 = vmatprep.subr.mxu0 0.0
    %1192 = vmatpush1.msra.mxu0 0.0
    %1193 = vmatprep.subr.mxu0 0.0
    %1194 = vmatpush1.msra.mxu0 0.0
    %1195 = vmatprep.subr.mxu0 0.0
    %1196 = vmatpush1.msra.mxu0 0.0
    %1197 = vmatprep.mubr.f32.mxu0 0.0
    %v1198 = vand.u32 %v1050, 4294901760
    %1199 = vmatmul.mubr.f32.gmra.mrb[0].mxu0 %v1198
    %v1200 = vpop.f32.mrb[0].mxu0
    %v1201 = vadd.f32 %v1125, %v1200
    %v1202 = vpop.f32.mrb[0].mxu0
    %1203 = vdwg.mxu0
    %1204 = vmatprep.subr.mxu0 0.0
    %v1205 = vand.u32 %v1047, 4294901760
    %v1206 = vsub.f32 %v1047, %v1205
    %1207 = vmatpush1.msra.mxu0 %v1206
    %1208 = vmatprep.subr.mxu0 0.0
    %1209 = vmatpush1.msra.mxu0 0.0
    %1210 = vmatprep.subr.mxu0 0.0
    %1211 = vmatpush1.msra.mxu0 0.0
    %1212 = vmatprep.subr.mxu0 0.0
    %1213 = vmatpush1.msra.mxu0 0.0
    %1214 = vmatprep.subr.mxu0 0.0
    %1215 = vmatpush1.msra.mxu0 0.0
    %1216 = vmatprep.subr.mxu0 0.0
    %1217 = vmatpush1.msra.mxu0 0.0
    %1218 = vmatprep.subr.mxu0 0.0
    %1219 = vmatpush1.msra.mxu0 0.0
    %1220 = vmatprep.subr.mxu0 0.0
    %1221 = vmatpush1.msra.mxu0 0.0
    %1222 = vmatprep.subr.mxu0 0.0
    %1223 = vmatpush1.msra.mxu0 0.0
    %1224 = vmatprep.subr.mxu0 0.0
    %1225 = vmatpush1.msra.mxu0 0.0
    %1226 = vmatprep.subr.mxu0 0.0
    %1227 = vmatpush1.msra.mxu0 0.0
    %1228 = vmatprep.subr.mxu0 0.0
    %1229 = vmatpush1.msra.mxu0 0.0
    %1230 = vmatprep.subr.mxu0 0.0
    %1231 = vmatpush1.msra.mxu0 0.0
    %1232 = vmatprep.subr.mxu0 0.0
    %1233 = vmatpush1.msra.mxu0 0.0
    %1234 = vmatprep.subr.mxu0 0.0
    %1235 = vmatpush1.msra.mxu0 0.0
    %1236 = vmatprep.subr.mxu0 0.0
    %1237 = vmatpush1.msra.mxu0 0.0
    %1238 = vmatprep.subr.mxu0 0.0
    %1239 = vmatpush1.msra.mxu0 0.0
    %1240 = vmatprep.subr.mxu0 0.0
    %1241 = vmatpush1.msra.mxu0 0.0
    %1242 = vmatprep.subr.mxu0 0.0
    %1243 = vmatpush1.msra.mxu0 0.0
    %1244 = vmatprep.subr.mxu0 0.0
    %1245 = vmatpush1.msra.mxu0 0.0
    %1246 = vmatprep.subr.mxu0 0.0
    %1247 = vmatpush1.msra.mxu0 0.0
    %1248 = vmatprep.subr.mxu0 0.0
    %1249 = vmatpush1.msra.mxu0 0.0
    %1250 = vmatprep.subr.mxu0 0.0
    %1251 = vmatpush1.msra.mxu0 0.0
    %1252 = vmatprep.subr.mxu0 0.0
    %1253 = vmatpush1.msra.mxu0 0.0
    %1254 = vmatprep.subr.mxu0 0.0
    %1255 = vmatpush1.msra.mxu0 0.0
    %1256 = vmatprep.subr.mxu0 0.0
    %1257 = vmatpush1.msra.mxu0 0.0
    %1258 = vmatprep.subr.mxu0 0.0
    %1259 = vmatpush1.msra.mxu0 0.0
    %1260 = vmatprep.subr.mxu0 0.0
    %1261 = vmatpush1.msra.mxu0 0.0
    %1262 = vmatprep.subr.mxu0 0.0
    %1263 = vmatpush1.msra.mxu0 0.0
    %1264 = vmatprep.subr.mxu0 0.0
    %1265 = vmatpush1.msra.mxu0 0.0
    %1266 = vmatprep.subr.mxu0 0.0
    %1267 = vmatpush1.msra.mxu0 0.0
    %1268 = vmatprep.subr.mxu0 0.0
    %1269 = vmatpush1.msra.mxu0 0.0
    %1270 = vmatprep.mubr.f32.mxu0 0.0
    %v1271 = vand.u32 %v1050, 4294901760
    %v1272 = vsub.f32 %v1050, %v1271
    %1273 = vmatmul.mubr.f32.gmra.mrb[0].mxu0 %v1272
    %v1274 = vpop.f32.mrb[0].mxu0
    %v1275 = vadd.f32 %v1201, %v1274
    %v1276 = vpop.f32.mrb[0].mxu0
    %1277 = vdwg.mxu0
    %1278 = vmatprep.subr.mxu0 0.0
    %v1279 = vand.u32 %v1047, 4294901760
    %1280 = vmatpush1.msra.mxu0 %v1279
    %1281 = vmatprep.subr.mxu0 0.0
    %1282 = vmatpush1.msra.mxu0 0.0
    %1283 = vmatprep.subr.mxu0 0.0
    %1284 = vmatpush1.msra.mxu0 0.0
    %1285 = vmatprep.subr.mxu0 0.0
    %1286 = vmatpush1.msra.mxu0 0.0
    %1287 = vmatprep.subr.mxu0 0.0
    %1288 = vmatpush1.msra.mxu0 0.0
    %1289 = vmatprep.subr.mxu0 0.0
    %1290 = vmatpush1.msra.mxu0 0.0
    %1291 = vmatprep.subr.mxu0 0.0
    %1292 = vmatpush1.msra.mxu0 0.0
    %1293 = vmatprep.subr.mxu0 0.0
    %1294 = vmatpush1.msra.mxu0 0.0
    %1295 = vmatprep.subr.mxu0 0.0
    %1296 = vmatpush1.msra.mxu0 0.0
    %1297 = vmatprep.subr.mxu0 0.0
    %1298 = vmatpush1.msra.mxu0 0.0
    %1299 = vmatprep.subr.mxu0 0.0
    %1300 = vmatpush1.msra.mxu0 0.0
    %1301 = vmatprep.subr.mxu0 0.0
    %1302 = vmatpush1.msra.mxu0 0.0
    %1303 = vmatprep.subr.mxu0 0.0
    %1304 = vmatpush1.msra.mxu0 0.0
    %1305 = vmatprep.subr.mxu0 0.0
    %1306 = vmatpush1.msra.mxu0 0.0
    %1307 = vmatprep.subr.mxu0 0.0
    %1308 = vmatpush1.msra.mxu0 0.0
    %1309 = vmatprep.subr.mxu0 0.0
    %1310 = vmatpush1.msra.mxu0 0.0
    %1311 = vmatprep.subr.mxu0 0.0
    %1312 = vmatpush1.msra.mxu0 0.0
    %1313 = vmatprep.subr.mxu0 0.0
    %1314 = vmatpush1.msra.mxu0 0.0
    %1315 = vmatprep.subr.mxu0 0.0
    %1316 = vmatpush1.msra.mxu0 0.0
    %1317 = vmatprep.subr.mxu0 0.0
    %1318 = vmatpush1.msra.mxu0 0.0
    %1319 = vmatprep.subr.mxu0 0.0
    %1320 = vmatpush1.msra.mxu0 0.0
    %1321 = vmatprep.subr.mxu0 0.0
    %1322 = vmatpush1.msra.mxu0 0.0
    %1323 = vmatprep.subr.mxu0 0.0
    %1324 = vmatpush1.msra.mxu0 0.0
    %1325 = vmatprep.subr.mxu0 0.0
    %1326 = vmatpush1.msra.mxu0 0.0
    %1327 = vmatprep.subr.mxu0 0.0
    %1328 = vmatpush1.msra.mxu0 0.0
    %1329 = vmatprep.subr.mxu0 0.0
    %1330 = vmatpush1.msra.mxu0 0.0
    %1331 = vmatprep.subr.mxu0 0.0
    %1332 = vmatpush1.msra.mxu0 0.0
    %1333 = vmatprep.subr.mxu0 0.0
    %1334 = vmatpush1.msra.mxu0 0.0
    %1335 = vmatprep.subr.mxu0 0.0
    %1336 = vmatpush1.msra.mxu0 0.0
    %1337 = vmatprep.subr.mxu0 0.0
    %1338 = vmatpush1.msra.mxu0 0.0
    %1339 = vmatprep.subr.mxu0 0.0
    %1340 = vmatpush1.msra.mxu0 0.0
    %1341 = vmatprep.subr.mxu0 0.0
    %1342 = vmatpush1.msra.mxu0 0.0
    %1343 = vmatprep.mubr.f32.mxu0 0.0
    %v1344 = vand.u32 %v1050, 4294901760
    %v1345 = vsub.f32 %v1050, %v1344
    %v1346 = vand.u32 %v1345, 4294901760
    %1347 = vmatmul.mubr.f32.gmra.mrb[0].mxu0 %v1346
    %v1348 = vpop.f32.mrb[0].mxu0
    %v1349 = vadd.f32 %v1275, %v1348
    %v1350 = vpop.f32.mrb[0].mxu0
    %1351 = vdwg.mxu0
    %1352 = vmatprep.subr.mxu0 0.0
    %v1353 = vand.u32 %v1047, 4294901760
    %v1354 = vsub.f32 %v1047, %v1353
    %v1355 = vand.u32 %v1354, 4294901760
    %1356 = vmatpush1.msra.mxu0 %v1355
    %1357 = vmatprep.subr.mxu0 0.0
    %1358 = vmatpush1.msra.mxu0 0.0
    %1359 = vmatprep.subr.mxu0 0.0
    %1360 = vmatpush1.msra.mxu0 0.0
    %1361 = vmatprep.subr.mxu0 0.0
    %1362 = vmatpush1.msra.mxu0 0.0
    %1363 = vmatprep.subr.mxu0 0.0
    %1364 = vmatpush1.msra.mxu0 0.0
    %1365 = vmatprep.subr.mxu0 0.0
    %1366 = vmatpush1.msra.mxu0 0.0
    %1367 = vmatprep.subr.mxu0 0.0
    %1368 = vmatpush1.msra.mxu0 0.0
    %1369 = vmatprep.subr.mxu0 0.0
    %1370 = vmatpush1.msra.mxu0 0.0
    %1371 = vmatprep.subr.mxu0 0.0
    %1372 = vmatpush1.msra.mxu0 0.0
    %1373 = vmatprep.subr.mxu0 0.0
    %1374 = vmatpush1.msra.mxu0 0.0
    %1375 = vmatprep.subr.mxu0 0.0
    %1376 = vmatpush1.msra.mxu0 0.0
    %1377 = vmatprep.subr.mxu0 0.0
    %1378 = vmatpush1.msra.mxu0 0.0
    %1379 = vmatprep.subr.mxu0 0.0
    %1380 = vmatpush1.msra.mxu0 0.0
    %1381 = vmatprep.subr.mxu0 0.0
    %1382 = vmatpush1.msra.mxu0 0.0
    %1383 = vmatprep.subr.mxu0 0.0
    %1384 = vmatpush1.msra.mxu0 0.0
    %1385 = vmatprep.subr.mxu0 0.0
    %1386 = vmatpush1.msra.mxu0 0.0
    %1387 = vmatprep.subr.mxu0 0.0
    %1388 = vmatpush1.msra.mxu0 0.0
    %1389 = vmatprep.subr.mxu0 0.0
    %1390 = vmatpush1.msra.mxu0 0.0
    %1391 = vmatprep.subr.mxu0 0.0
    %1392 = vmatpush1.msra.mxu0 0.0
    %1393 = vmatprep.subr.mxu0 0.0
    %1394 = vmatpush1.msra.mxu0 0.0
    %1395 = vmatprep.subr.mxu0 0.0
    %1396 = vmatpush1.msra.mxu0 0.0
    %1397 = vmatprep.subr.mxu0 0.0
    %1398 = vmatpush1.msra.mxu0 0.0
    %1399 = vmatprep.subr.mxu0 0.0
    %1400 = vmatpush1.msra.mxu0 0.0
    %1401 = vmatprep.subr.mxu0 0.0
    %1402 = vmatpush1.msra.mxu0 0.0
    %1403 = vmatprep.subr.mxu0 0.0
    %1404 = vmatpush1.msra.mxu0 0.0
    %1405 = vmatprep.subr.mxu0 0.0
    %1406 = vmatpush1.msra.mxu0 0.0
    %1407 = vmatprep.subr.mxu0 0.0
    %1408 = vmatpush1.msra.mxu0 0.0
    %1409 = vmatprep.subr.mxu0 0.0
    %1410 = vmatpush1.msra.mxu0 0.0
    %1411 = vmatprep.subr.mxu0 0.0
    %1412 = vmatpush1.msra.mxu0 0.0
    %1413 = vmatprep.subr.mxu0 0.0
    %1414 = vmatpush1.msra.mxu0 0.0
    %1415 = vmatprep.subr.mxu0 0.0
    %1416 = vmatpush1.msra.mxu0 0.0
    %1417 = vmatprep.subr.mxu0 0.0
    %1418 = vmatpush1.msra.mxu0 0.0
    %1419 = vmatprep.mubr.f32.mxu0 0.0
    %v1420 = vand.u32 %v1050, 4294901760
    %1421 = vmatmul.mubr.f32.gmra.mrb[0].mxu0 %v1420
    %v1422 = vpop.f32.mrb[0].mxu0
    %v1423 = vadd.f32 %v1349, %v1422
    %v1424 = vpop.f32.mrb[0].mxu0
    %1425 = vdwg.mxu0
    %1426 = vmatprep.subr.mxu0 0.0
    %v1427 = vand.u32 %v1047, 4294901760
    %1428 = vmatpush1.msra.mxu0 %v1427
    %1429 = vmatprep.subr.mxu0 0.0
    %1430 = vmatpush1.msra.mxu0 0.0
    %1431 = vmatprep.subr.mxu0 0.0
    %1432 = vmatpush1.msra.mxu0 0.0
    %1433 = vmatprep.subr.mxu0 0.0
    %1434 = vmatpush1.msra.mxu0 0.0
    %1435 = vmatprep.subr.mxu0 0.0
    %1436 = vmatpush1.msra.mxu0 0.0
    %1437 = vmatprep.subr.mxu0 0.0
    %1438 = vmatpush1.msra.mxu0 0.0
    %1439 = vmatprep.subr.mxu0 0.0
    %1440 = vmatpush1.msra.mxu0 0.0
    %1441 = vmatprep.subr.mxu0 0.0
    %1442 = vmatpush1.msra.mxu0 0.0
    %1443 = vmatprep.subr.mxu0 0.0
    %1444 = vmatpush1.msra.mxu0 0.0
    %1445 = vmatprep.subr.mxu0 0.0
    %1446 = vmatpush1.msra.mxu0 0.0
    %1447 = vmatprep.subr.mxu0 0.0
    %1448 = vmatpush1.msra.mxu0 0.0
    %1449 = vmatprep.subr.mxu0 0.0
    %1450 = vmatpush1.msra.mxu0 0.0
    %1451 = vmatprep.subr.mxu0 0.0
    %1452 = vmatpush1.msra.mxu0 0.0
    %1453 = vmatprep.subr.mxu0 0.0
    %1454 = vmatpush1.msra.mxu0 0.0
    %1455 = vmatprep.subr.mxu0 0.0
    %1456 = vmatpush1.msra.mxu0 0.0
    %1457 = vmatprep.subr.mxu0 0.0
    %1458 = vmatpush1.msra.mxu0 0.0
    %1459 = vmatprep.subr.mxu0 0.0
    %1460 = vmatpush1.msra.mxu0 0.0
    %1461 = vmatprep.subr.mxu0 0.0
    %1462 = vmatpush1.msra.mxu0 0.0
    %1463 = vmatprep.subr.mxu0 0.0
    %1464 = vmatpush1.msra.mxu0 0.0
    %1465 = vmatprep.subr.mxu0 0.0
    %1466 = vmatpush1.msra.mxu0 0.0
    %1467 = vmatprep.subr.mxu0 0.0
    %1468 = vmatpush1.msra.mxu0 0.0
    %1469 = vmatprep.subr.mxu0 0.0
    %1470 = vmatpush1.msra.mxu0 0.0
    %1471 = vmatprep.subr.mxu0 0.0
    %1472 = vmatpush1.msra.mxu0 0.0
    %1473 = vmatprep.subr.mxu0 0.0
    %1474 = vmatpush1.msra.mxu0 0.0
    %1475 = vmatprep.subr.mxu0 0.0
    %1476 = vmatpush1.msra.mxu0 0.0
    %1477 = vmatprep.subr.mxu0 0.0
    %1478 = vmatpush1.msra.mxu0 0.0
    %1479 = vmatprep.subr.mxu0 0.0
    %1480 = vmatpush1.msra.mxu0 0.0
    %1481 = vmatprep.subr.mxu0 0.0
    %1482 = vmatpush1.msra.mxu0 0.0
    %1483 = vmatprep.subr.mxu0 0.0
    %1484 = vmatpush1.msra.mxu0 0.0
    %1485 = vmatprep.subr.mxu0 0.0
    %1486 = vmatpush1.msra.mxu0 0.0
    %1487 = vmatprep.subr.mxu0 0.0
    %1488 = vmatpush1.msra.mxu0 0.0
    %1489 = vmatprep.subr.mxu0 0.0
    %1490 = vmatpush1.msra.mxu0 0.0
    %1491 = vmatprep.mubr.f32.mxu0 0.0
    %v1492 = vand.u32 %v1050, 4294901760
    %1493 = vmatmul.mubr.f32.gmra.mrb[0].mxu0 %v1492
    %v1494 = vpop.f32.mrb[0].mxu0
    %v1495 = vadd.f32 %v1423, %v1494
    %v1496 = vpop.f32.mrb[0].mxu0
    %1497 = vdwg.mxu0
    %v1499 = vsel %vm970, %v1046, 0
    %1501 = vmatprep.subr.mxu0 0.0
    %v1502 = vand.u32 %v1048, 4294901760
    %1503 = vmatpush1.msra.mxu0 %v1502
    %1504 = vmatprep.subr.mxu0 0.0
    %1505 = vmatpush1.msra.mxu0 0.0
    %1506 = vmatprep.subr.mxu0 0.0
    %1507 = vmatpush1.msra.mxu0 0.0
    %1508 = vmatprep.subr.mxu0 0.0
    %1509 = vmatpush1.msra.mxu0 0.0
    %1510 = vmatprep.subr.mxu0 0.0
    %1511 = vmatpush1.msra.mxu0 0.0
    %1512 = vmatprep.subr.mxu0 0.0
    %1513 = vmatpush1.msra.mxu0 0.0
    %1514 = vmatprep.subr.mxu0 0.0
    %1515 = vmatpush1.msra.mxu0 0.0
    %1516 = vmatprep.subr.mxu0 0.0
    %1517 = vmatpush1.msra.mxu0 0.0
    %1518 = vmatprep.subr.mxu0 0.0
    %1519 = vmatpush1.msra.mxu0 0.0
    %1520 = vmatprep.subr.mxu0 0.0
    %1521 = vmatpush1.msra.mxu0 0.0
    %1522 = vmatprep.subr.mxu0 0.0
    %1523 = vmatpush1.msra.mxu0 0.0
    %1524 = vmatprep.subr.mxu0 0.0
    %1525 = vmatpush1.msra.mxu0 0.0
    %1526 = vmatprep.subr.mxu0 0.0
    %1527 = vmatpush1.msra.mxu0 0.0
    %1528 = vmatprep.subr.mxu0 0.0
    %1529 = vmatpush1.msra.mxu0 0.0
    %1530 = vmatprep.subr.mxu0 0.0
    %1531 = vmatpush1.msra.mxu0 0.0
    %1532 = vmatprep.subr.mxu0 0.0
    %1533 = vmatpush1.msra.mxu0 0.0
    %1534 = vmatprep.subr.mxu0 0.0
    %1535 = vmatpush1.msra.mxu0 0.0
    %1536 = vmatprep.subr.mxu0 0.0
    %1537 = vmatpush1.msra.mxu0 0.0
    %1538 = vmatprep.subr.mxu0 0.0
    %1539 = vmatpush1.msra.mxu0 0.0
    %1540 = vmatprep.subr.mxu0 0.0
    %1541 = vmatpush1.msra.mxu0 0.0
    %1542 = vmatprep.subr.mxu0 0.0
    %1543 = vmatpush1.msra.mxu0 0.0
    %1544 = vmatprep.subr.mxu0 0.0
    %1545 = vmatpush1.msra.mxu0 0.0
    %1546 = vmatprep.subr.mxu0 0.0
    %1547 = vmatpush1.msra.mxu0 0.0
    %1548 = vmatprep.subr.mxu0 0.0
    %1549 = vmatpush1.msra.mxu0 0.0
    %1550 = vmatprep.subr.mxu0 0.0
    %1551 = vmatpush1.msra.mxu0 0.0
    %1552 = vmatprep.subr.mxu0 0.0
    %1553 = vmatpush1.msra.mxu0 0.0
    %1554 = vmatprep.subr.mxu0 0.0
    %1555 = vmatpush1.msra.mxu0 0.0
    %1556 = vmatprep.subr.mxu0 0.0
    %1557 = vmatpush1.msra.mxu0 0.0
    %1558 = vmatprep.subr.mxu0 0.0
    %1559 = vmatpush1.msra.mxu0 0.0
    %1560 = vmatprep.subr.mxu0 0.0
    %1561 = vmatpush1.msra.mxu0 0.0
    %1562 = vmatprep.subr.mxu0 0.0
    %1563 = vmatpush1.msra.mxu0 0.0
    %1564 = vmatprep.subr.mxu0 0.0
    %1565 = vmatpush1.msra.mxu0 0.0
    %1566 = vmatprep.mubr.f32.mxu0 0.0
    %v1567 = vand.u32 %v1499, 4294901760
    %v1568 = vsub.f32 %v1499, %v1567
    %v1569 = vand.u32 %v1568, 4294901760
    %v1570 = vsub.f32 %v1568, %v1569
    %v1571 = vand.u32 %v1570, 4294901760
    %1572 = vmatmul.mubr.f32.gmra.mrb[0].mxu0 %v1571
    %v1573 = vpop.f32.mrb[0].mxu0
    %v1574 = vadd.f32 0.0, %v1573
    %v1575 = vpop.f32.mrb[0].mxu0
    %1576 = vdwg.mxu0
    %1577 = vmatprep.subr.mxu0 0.0
    %v1578 = vand.u32 %v1048, 4294901760
    %v1579 = vsub.f32 %v1048, %v1578
    %v1580 = vand.u32 %v1579, 4294901760
    %v1581 = vsub.f32 %v1579, %v1580
    %v1582 = vand.u32 %v1581, 4294901760
    %1583 = vmatpush1.msra.mxu0 %v1582
    %1584 = vmatprep.subr.mxu0 0.0
    %1585 = vmatpush1.msra.mxu0 0.0
    %1586 = vmatprep.subr.mxu0 0.0
    %1587 = vmatpush1.msra.mxu0 0.0
    %1588 = vmatprep.subr.mxu0 0.0
    %1589 = vmatpush1.msra.mxu0 0.0
    %1590 = vmatprep.subr.mxu0 0.0
    %1591 = vmatpush1.msra.mxu0 0.0
    %1592 = vmatprep.subr.mxu0 0.0
    %1593 = vmatpush1.msra.mxu0 0.0
    %1594 = vmatprep.subr.mxu0 0.0
    %1595 = vmatpush1.msra.mxu0 0.0
    %1596 = vmatprep.subr.mxu0 0.0
    %1597 = vmatpush1.msra.mxu0 0.0
    %1598 = vmatprep.subr.mxu0 0.0
    %1599 = vmatpush1.msra.mxu0 0.0
    %1600 = vmatprep.subr.mxu0 0.0
    %1601 = vmatpush1.msra.mxu0 0.0
    %1602 = vmatprep.subr.mxu0 0.0
    %1603 = vmatpush1.msra.mxu0 0.0
    %1604 = vmatprep.subr.mxu0 0.0
    %1605 = vmatpush1.msra.mxu0 0.0
    %1606 = vmatprep.subr.mxu0 0.0
    %1607 = vmatpush1.msra.mxu0 0.0
    %1608 = vmatprep.subr.mxu0 0.0
    %1609 = vmatpush1.msra.mxu0 0.0
    %1610 = vmatprep.subr.mxu0 0.0
    %1611 = vmatpush1.msra.mxu0 0.0
    %1612 = vmatprep.subr.mxu0 0.0
    %1613 = vmatpush1.msra.mxu0 0.0
    %1614 = vmatprep.subr.mxu0 0.0
    %1615 = vmatpush1.msra.mxu0 0.0
    %1616 = vmatprep.subr.mxu0 0.0
    %1617 = vmatpush1.msra.mxu0 0.0
    %1618 = vmatprep.subr.mxu0 0.0
    %1619 = vmatpush1.msra.mxu0 0.0
    %1620 = vmatprep.subr.mxu0 0.0
    %1621 = vmatpush1.msra.mxu0 0.0
    %1622 = vmatprep.subr.mxu0 0.0
    %1623 = vmatpush1.msra.mxu0 0.0
    %1624 = vmatprep.subr.mxu0 0.0
    %1625 = vmatpush1.msra.mxu0 0.0
    %1626 = vmatprep.subr.mxu0 0.0
    %1627 = vmatpush1.msra.mxu0 0.0
    %1628 = vmatprep.subr.mxu0 0.0
    %1629 = vmatpush1.msra.mxu0 0.0
    %1630 = vmatprep.subr.mxu0 0.0
    %1631 = vmatpush1.msra.mxu0 0.0
    %1632 = vmatprep.subr.mxu0 0.0
    %1633 = vmatpush1.msra.mxu0 0.0
    %1634 = vmatprep.subr.mxu0 0.0
    %1635 = vmatpush1.msra.mxu0 0.0
    %1636 = vmatprep.subr.mxu0 0.0
    %1637 = vmatpush1.msra.mxu0 0.0
    %1638 = vmatprep.subr.mxu0 0.0
    %1639 = vmatpush1.msra.mxu0 0.0
    %1640 = vmatprep.subr.mxu0 0.0
    %1641 = vmatpush1.msra.mxu0 0.0
    %1642 = vmatprep.subr.mxu0 0.0
    %1643 = vmatpush1.msra.mxu0 0.0
    %1644 = vmatprep.subr.mxu0 0.0
    %1645 = vmatpush1.msra.mxu0 0.0
    %1646 = vmatprep.mubr.f32.mxu0 0.0
    %v1647 = vand.u32 %v1499, 4294901760
    %1648 = vmatmul.mubr.f32.gmra.mrb[0].mxu0 %v1647
    %v1649 = vpop.f32.mrb[0].mxu0
    %v1650 = vadd.f32 %v1574, %v1649
    %v1651 = vpop.f32.mrb[0].mxu0
    %1652 = vdwg.mxu0
    %1653 = vmatprep.subr.mxu0 0.0
    %v1654 = vand.u32 %v1048, 4294901760
    %v1655 = vsub.f32 %v1048, %v1654
    %1656 = vmatpush1.msra.mxu0 %v1655
    %1657 = vmatprep.subr.mxu0 0.0
    %1658 = vmatpush1.msra.mxu0 0.0
    %1659 = vmatprep.subr.mxu0 0.0
    %1660 = vmatpush1.msra.mxu0 0.0
    %1661 = vmatprep.subr.mxu0 0.0
    %1662 = vmatpush1.msra.mxu0 0.0
    %1663 = vmatprep.subr.mxu0 0.0
    %1664 = vmatpush1.msra.mxu0 0.0
    %1665 = vmatprep.subr.mxu0 0.0
    %1666 = vmatpush1.msra.mxu0 0.0
    %1667 = vmatprep.subr.mxu0 0.0
    %1668 = vmatpush1.msra.mxu0 0.0
    %1669 = vmatprep.subr.mxu0 0.0
    %1670 = vmatpush1.msra.mxu0 0.0
    %1671 = vmatprep.subr.mxu0 0.0
    %1672 = vmatpush1.msra.mxu0 0.0
    %1673 = vmatprep.subr.mxu0 0.0
    %1674 = vmatpush1.msra.mxu0 0.0
    %1675 = vmatprep.subr.mxu0 0.0
    %1676 = vmatpush1.msra.mxu0 0.0
    %1677 = vmatprep.subr.mxu0 0.0
    %1678 = vmatpush1.msra.mxu0 0.0
    %1679 = vmatprep.subr.mxu0 0.0
    %1680 = vmatpush1.msra.mxu0 0.0
    %1681 = vmatprep.subr.mxu0 0.0
    %1682 = vmatpush1.msra.mxu0 0.0
    %1683 = vmatprep.subr.mxu0 0.0
    %1684 = vmatpush1.msra.mxu0 0.0
    %1685 = vmatprep.subr.mxu0 0.0
    %1686 = vmatpush1.msra.mxu0 0.0
    %1687 = vmatprep.subr.mxu0 0.0
    %1688 = vmatpush1.msra.mxu0 0.0
    %1689 = vmatprep.subr.mxu0 0.0
    %1690 = vmatpush1.msra.mxu0 0.0
    %1691 = vmatprep.subr.mxu0 0.0
    %1692 = vmatpush1.msra.mxu0 0.0
    %1693 = vmatprep.subr.mxu0 0.0
    %1694 = vmatpush1.msra.mxu0 0.0
    %1695 = vmatprep.subr.mxu0 0.0
    %1696 = vmatpush1.msra.mxu0 0.0
    %1697 = vmatprep.subr.mxu0 0.0
    %1698 = vmatpush1.msra.mxu0 0.0
    %1699 = vmatprep.subr.mxu0 0.0
    %1700 = vmatpush1.msra.mxu0 0.0
    %1701 = vmatprep.subr.mxu0 0.0
    %1702 = vmatpush1.msra.mxu0 0.0
    %1703 = vmatprep.subr.mxu0 0.0
    %1704 = vmatpush1.msra.mxu0 0.0
    %1705 = vmatprep.subr.mxu0 0.0
    %1706 = vmatpush1.msra.mxu0 0.0
    %1707 = vmatprep.subr.mxu0 0.0
    %1708 = vmatpush1.msra.mxu0 0.0
    %1709 = vmatprep.subr.mxu0 0.0
    %1710 = vmatpush1.msra.mxu0 0.0
    %1711 = vmatprep.subr.mxu0 0.0
    %1712 = vmatpush1.msra.mxu0 0.0
    %1713 = vmatprep.subr.mxu0 0.0
    %1714 = vmatpush1.msra.mxu0 0.0
    %1715 = vmatprep.subr.mxu0 0.0
    %1716 = vmatpush1.msra.mxu0 0.0
    %1717 = vmatprep.subr.mxu0 0.0
    %1718 = vmatpush1.msra.mxu0 0.0
    %1719 = vmatprep.mubr.f32.mxu0 0.0
    %v1720 = vand.u32 %v1499, 4294901760
    %v1721 = vsub.f32 %v1499, %v1720
    %1722 = vmatmul.mubr.f32.gmra.mrb[0].mxu0 %v1721
    %v1723 = vpop.f32.mrb[0].mxu0
    %v1724 = vadd.f32 %v1650, %v1723
    %v1725 = vpop.f32.mrb[0].mxu0
    %1726 = vdwg.mxu0
    %1727 = vmatprep.subr.mxu0 0.0
    %v1728 = vand.u32 %v1048, 4294901760
    %1729 = vmatpush1.msra.mxu0 %v1728
    %1730 = vmatprep.subr.mxu0 0.0
    %1731 = vmatpush1.msra.mxu0 0.0
    %1732 = vmatprep.subr.mxu0 0.0
    %1733 = vmatpush1.msra.mxu0 0.0
    %1734 = vmatprep.subr.mxu0 0.0
    %1735 = vmatpush1.msra.mxu0 0.0
    %1736 = vmatprep.subr.mxu0 0.0
    %1737 = vmatpush1.msra.mxu0 0.0
    %1738 = vmatprep.subr.mxu0 0.0
    %1739 = vmatpush1.msra.mxu0 0.0
    %1740 = vmatprep.subr.mxu0 0.0
    %1741 = vmatpush1.msra.mxu0 0.0
    %1742 = vmatprep.subr.mxu0 0.0
    %1743 = vmatpush1.msra.mxu0 0.0
    %1744 = vmatprep.subr.mxu0 0.0
    %1745 = vmatpush1.msra.mxu0 0.0
    %1746 = vmatprep.subr.mxu0 0.0
    %1747 = vmatpush1.msra.mxu0 0.0
    %1748 = vmatprep.subr.mxu0 0.0
    %1749 = vmatpush1.msra.mxu0 0.0
    %1750 = vmatprep.subr.mxu0 0.0
    %1751 = vmatpush1.msra.mxu0 0.0
    %1752 = vmatprep.subr.mxu0 0.0
    %1753 = vmatpush1.msra.mxu0 0.0
    %1754 = vmatprep.subr.mxu0 0.0
    %1755 = vmatpush1.msra.mxu0 0.0
    %1756 = vmatprep.subr.mxu0 0.0
    %1757 = vmatpush1.msra.mxu0 0.0
    %1758 = vmatprep.subr.mxu0 0.0
    %1759 = vmatpush1.msra.mxu0 0.0
    %1760 = vmatprep.subr.mxu0 0.0
    %1761 = vmatpush1.msra.mxu0 0.0
    %1762 = vmatprep.subr.mxu0 0.0
    %1763 = vmatpush1.msra.mxu0 0.0
    %1764 = vmatprep.subr.mxu0 0.0
    %1765 = vmatpush1.msra.mxu0 0.0
    %1766 = vmatprep.subr.mxu0 0.0
    %1767 = vmatpush1.msra.mxu0 0.0
    %1768 = vmatprep.subr.mxu0 0.0
    %1769 = vmatpush1.msra.mxu0 0.0
    %1770 = vmatprep.subr.mxu0 0.0
    %1771 = vmatpush1.msra.mxu0 0.0
    %1772 = vmatprep.subr.mxu0 0.0
    %1773 = vmatpush1.msra.mxu0 0.0
    %1774 = vmatprep.subr.mxu0 0.0
    %1775 = vmatpush1.msra.mxu0 0.0
    %1776 = vmatprep.subr.mxu0 0.0
    %1777 = vmatpush1.msra.mxu0 0.0
    %1778 = vmatprep.subr.mxu0 0.0
    %1779 = vmatpush1.msra.mxu0 0.0
    %1780 = vmatprep.subr.mxu0 0.0
    %1781 = vmatpush1.msra.mxu0 0.0
    %1782 = vmatprep.subr.mxu0 0.0
    %1783 = vmatpush1.msra.mxu0 0.0
    %1784 = vmatprep.subr.mxu0 0.0
    %1785 = vmatpush1.msra.mxu0 0.0
    %1786 = vmatprep.subr.mxu0 0.0
    %1787 = vmatpush1.msra.mxu0 0.0
    %1788 = vmatprep.subr.mxu0 0.0
    %1789 = vmatpush1.msra.mxu0 0.0
    %1790 = vmatprep.subr.mxu0 0.0
    %1791 = vmatpush1.msra.mxu0 0.0
    %1792 = vmatprep.mubr.f32.mxu0 0.0
    %v1793 = vand.u32 %v1499, 4294901760
    %v1794 = vsub.f32 %v1499, %v1793
    %v1795 = vand.u32 %v1794, 4294901760
    %1796 = vmatmul.mubr.f32.gmra.mrb[0].mxu0 %v1795
    %v1797 = vpop.f32.mrb[0].mxu0
    %v1798 = vadd.f32 %v1724, %v1797
    %v1799 = vpop.f32.mrb[0].mxu0
    %1800 = vdwg.mxu0
    %1801 = vmatprep.subr.mxu0 0.0
    %v1802 = vand.u32 %v1048, 4294901760
    %v1803 = vsub.f32 %v1048, %v1802
    %v1804 = vand.u32 %v1803, 4294901760
    %1805 = vmatpush1.msra.mxu0 %v1804
    %1806 = vmatprep.subr.mxu0 0.0
    %1807 = vmatpush1.msra.mxu0 0.0
    %1808 = vmatprep.subr.mxu0 0.0
    %1809 = vmatpush1.msra.mxu0 0.0
    %1810 = vmatprep.subr.mxu0 0.0
    %1811 = vmatpush1.msra.mxu0 0.0
    %1812 = vmatprep.subr.mxu0 0.0
    %1813 = vmatpush1.msra.mxu0 0.0
    %1814 = vmatprep.subr.mxu0 0.0
    %1815 = vmatpush1.msra.mxu0 0.0
    %1816 = vmatprep.subr.mxu0 0.0
    %1817 = vmatpush1.msra.mxu0 0.0
    %1818 = vmatprep.subr.mxu0 0.0
    %1819 = vmatpush1.msra.mxu0 0.0
    %1820 = vmatprep.subr.mxu0 0.0
    %1821 = vmatpush1.msra.mxu0 0.0
    %1822 = vmatprep.subr.mxu0 0.0
    %1823 = vmatpush1.msra.mxu0 0.0
    %1824 = vmatprep.subr.mxu0 0.0
    %1825 = vmatpush1.msra.mxu0 0.0
    %1826 = vmatprep.subr.mxu0 0.0
    %1827 = vmatpush1.msra.mxu0 0.0
    %1828 = vmatprep.subr.mxu0 0.0
    %1829 = vmatpush1.msra.mxu0 0.0
    %1830 = vmatprep.subr.mxu0 0.0
    %1831 = vmatpush1.msra.mxu0 0.0
    %1832 = vmatprep.subr.mxu0 0.0
    %1833 = vmatpush1.msra.mxu0 0.0
    %1834 = vmatprep.subr.mxu0 0.0
    %1835 = vmatpush1.msra.mxu0 0.0
    %1836 = vmatprep.subr.mxu0 0.0
    %1837 = vmatpush1.msra.mxu0 0.0
    %1838 = vmatprep.subr.mxu0 0.0
    %1839 = vmatpush1.msra.mxu0 0.0
    %1840 = vmatprep.subr.mxu0 0.0
    %1841 = vmatpush1.msra.mxu0 0.0
    %1842 = vmatprep.subr.mxu0 0.0
    %1843 = vmatpush1.msra.mxu0 0.0
    %1844 = vmatprep.subr.mxu0 0.0
    %1845 = vmatpush1.msra.mxu0 0.0
    %1846 = vmatprep.subr.mxu0 0.0
    %1847 = vmatpush1.msra.mxu0 0.0
    %1848 = vmatprep.subr.mxu0 0.0
    %1849 = vmatpush1.msra.mxu0 0.0
    %1850 = vmatprep.subr.mxu0 0.0
    %1851 = vmatpush1.msra.mxu0 0.0
    %1852 = vmatprep.subr.mxu0 0.0
    %1853 = vmatpush1.msra.mxu0 0.0
    %1854 = vmatprep.subr.mxu0 0.0
    %1855 = vmatpush1.msra.mxu0 0.0
    %1856 = vmatprep.subr.mxu0 0.0
    %1857 = vmatpush1.msra.mxu0 0.0
    %1858 = vmatprep.subr.mxu0 0.0
    %1859 = vmatpush1.msra.mxu0 0.0
    %1860 = vmatprep.subr.mxu0 0.0
    %1861 = vmatpush1.msra.mxu0 0.0
    %1862 = vmatprep.subr.mxu0 0.0
    %1863 = vmatpush1.msra.mxu0 0.0
    %1864 = vmatprep.subr.mxu0 0.0
    %1865 = vmatpush1.msra.mxu0 0.0
    %1866 = vmatprep.subr.mxu0 0.0
    %1867 = vmatpush1.msra.mxu0 0.0
    %1868 = vmatprep.mubr.f32.mxu0 0.0
    %v1869 = vand.u32 %v1499, 4294901760
    %1870 = vmatmul.mubr.f32.gmra.mrb[0].mxu0 %v1869
    %v1871 = vpop.f32.mrb[0].mxu0
    %v1872 = vadd.f32 %v1798, %v1871
    %v1873 = vpop.f32.mrb[0].mxu0
    %1874 = vdwg.mxu0
    %1875 = vmatprep.subr.mxu0 0.0
    %v1876 = vand.u32 %v1048, 4294901760
    %1877 = vmatpush1.msra.mxu0 %v1876
    %1878 = vmatprep.subr.mxu0 0.0
    %1879 = vmatpush1.msra.mxu0 0.0
    %1880 = vmatprep.subr.mxu0 0.0
    %1881 = vmatpush1.msra.mxu0 0.0
    %1882 = vmatprep.subr.mxu0 0.0
    %1883 = vmatpush1.msra.mxu0 0.0
    %1884 = vmatprep.subr.mxu0 0.0
    %1885 = vmatpush1.msra.mxu0 0.0
    %1886 = vmatprep.subr.mxu0 0.0
    %1887 = vmatpush1.msra.mxu0 0.0
    %1888 = vmatprep.subr.mxu0 0.0
    %1889 = vmatpush1.msra.mxu0 0.0
    %1890 = vmatprep.subr.mxu0 0.0
    %1891 = vmatpush1.msra.mxu0 0.0
    %1892 = vmatprep.subr.mxu0 0.0
    %1893 = vmatpush1.msra.mxu0 0.0
    %1894 = vmatprep.subr.mxu0 0.0
    %1895 = vmatpush1.msra.mxu0 0.0
    %1896 = vmatprep.subr.mxu0 0.0
    %1897 = vmatpush1.msra.mxu0 0.0
    %1898 = vmatprep.subr.mxu0 0.0
    %1899 = vmatpush1.msra.mxu0 0.0
    %1900 = vmatprep.subr.mxu0 0.0
    %1901 = vmatpush1.msra.mxu0 0.0
    %1902 = vmatprep.subr.mxu0 0.0
    %1903 = vmatpush1.msra.mxu0 0.0
    %1904 = vmatprep.subr.mxu0 0.0
    %1905 = vmatpush1.msra.mxu0 0.0
    %1906 = vmatprep.subr.mxu0 0.0
    %1907 = vmatpush1.msra.mxu0 0.0
    %1908 = vmatprep.subr.mxu0 0.0
    %1909 = vmatpush1.msra.mxu0 0.0
    %1910 = vmatprep.subr.mxu0 0.0
    %1911 = vmatpush1.msra.mxu0 0.0
    %1912 = vmatprep.subr.mxu0 0.0
    %1913 = vmatpush1.msra.mxu0 0.0
    %1914 = vmatprep.subr.mxu0 0.0
    %1915 = vmatpush1.msra.mxu0 0.0
    %1916 = vmatprep.subr.mxu0 0.0
    %1917 = vmatpush1.msra.mxu0 0.0
    %1918 = vmatprep.subr.mxu0 0.0
    %1919 = vmatpush1.msra.mxu0 0.0
    %1920 = vmatprep.subr.mxu0 0.0
    %1921 = vmatpush1.msra.mxu0 0.0
    %1922 = vmatprep.subr.mxu0 0.0
    %1923 = vmatpush1.msra.mxu0 0.0
    %1924 = vmatprep.subr.mxu0 0.0
    %1925 = vmatpush1.msra.mxu0 0.0
    %1926 = vmatprep.subr.mxu0 0.0
    %1927 = vmatpush1.msra.mxu0 0.0
    %1928 = vmatprep.subr.mxu0 0.0
    %1929 = vmatpush1.msra.mxu0 0.0
    %1930 = vmatprep.subr.mxu0 0.0
    %1931 = vmatpush1.msra.mxu0 0.0
    %1932 = vmatprep.subr.mxu0 0.0
    %1933 = vmatpush1.msra.mxu0 0.0
    %1934 = vmatprep.subr.mxu0 0.0
    %1935 = vmatpush1.msra.mxu0 0.0
    %1936 = vmatprep.subr.mxu0 0.0
    %1937 = vmatpush1.msra.mxu0 0.0
    %1938 = vmatprep.subr.mxu0 0.0
    %1939 = vmatpush1.msra.mxu0 0.0
    %1940 = vmatprep.mubr.f32.mxu0 0.0
    %v1941 = vand.u32 %v1499, 4294901760
    %1942 = vmatmul.mubr.f32.gmra.mrb[0].mxu0 %v1941
    %v1943 = vpop.f32.mrb[0].mxu0
    %v1944 = vadd.f32 %v1872, %v1943
    %v1945 = vpop.f32.mrb[0].mxu0
    %1946 = vdwg.mxu0
    %1947 = vst.msk [vmem:[#allocation8] sm:$0xff] %vm63, %v1495
    %1948 = vst.msk [vmem:[#allocation8 + $0x8] sm:$0xff] %vm63, %v1944
    %1949 = vst.msk [vmem:[#allocation9] sm:$0xff] %vm970, %v1045
    %1950 = vst.msk [vmem:[#allocation9 + $0x8] sm:$0xff] %vm970, %v1046
    // Predicated region
    $region26: #{tpu_custom_call.1} parent=1 // pred_check
      _
    $region27: #{tpu_custom_call.1} parent=1 // pred_check_branch
      %1952 = sbr.rel (0) target = $region29
    $region28: #{tpu_custom_call.1} parent=1 // pred_region
      %s1954 = ssub.s32 256, 256
      %1955 = vsyncadd [#allocation4], %s1954
      %s1956 = sshll.u32 [#allocation8], 4
      %s1957 = int_to_ptr.vmem [resolvable:$true] %s1956
      %1962 = dma.vmem_to_hbm [thread:$0]  %s1957, 256, %s3, [#allocation4], 128, 128, 8
    $region29: #{tpu_custom_call.1} parent=1 // pred_fallthru
      _
    // Predicated region
    $region30: #{tpu_custom_call.1} parent=1 // pred_check
      _
    $region31: #{tpu_custom_call.1} parent=1 // pred_check_branch
      %1964 = sbr.rel (0) target = $region33
    $region32: #{tpu_custom_call.1} parent=1 // pred_region
      %s1966 = ssub.s32 256, 256
      %1967 = vsyncadd [#allocation10], %s1966
      %s1968 = sshll.u32 [#allocation9], 4
      %s1969 = int_to_ptr.vmem [resolvable:$true] %s1968
      %1974 = dma.vmem_to_hbm [thread:$0]  %s1969, 256, %s4, [#allocation10], 128, 128, 8
    $region33: #{tpu_custom_call.1} parent=1 // pred_fallthru
      _
    // Predicated region
    $region34: #{tpu_custom_call.1} parent=1 // pred_check
      _
    $region35: #{tpu_custom_call.1} parent=1 // pred_check_branch
      %1976 = sbr.rel (0) target = $region37
    $region36: #{tpu_custom_call.1} parent=1 // pred_region
      %1977 = dma.done [#allocation4], 256
    $region37: #{tpu_custom_call.1} parent=1 // pred_fallthru
      _
    // Predicated region
    $region38: #{tpu_custom_call.1} parent=1 // pred_check
      _
    $region39: #{tpu_custom_call.1} parent=1 // pred_check_branch
      %1979 = sbr.rel (0) target = $region41
    $region40: #{tpu_custom_call.1} parent=1 // pred_region
      %1980 = dma.done [#allocation10], 256
    $region41: #{tpu_custom_call.1} parent=1 // pred_fallthru
      _
    %1981 = vsyncpa [#allocation3], 1
    %1982 = vsyncpa [#allocation6], 1
    %1983 = vsyncpa [#allocation4], 1
    %1984 = vsyncpa [#allocation10], 1

// kernel: tpu_custom_call.1
$region0: #{tpu_custom_call.1}
  #allocation0 [shape = 'u32[]', space=smem, size = 0x4, offset = 0x4, fixed_abs, tag = 'smem constant byte address 0x4 - core index']
  #allocation1 [shape = 'u32[144,128]{1,0:T(1,128)}', space=vmem, size = 0x12000, scoped, tag = 'internal scratch']
  %s0 = inlined_call_operand.hbm [shape: f32[2,8,32], index: 0, kind: input, shape index: {}]
  %s1 = inlined_call_operand.hbm [shape: f32[2,8,32], index: 1, kind: input, shape index: {}]
  %s2 = inlined_call_operand.hbm [shape: f32[2,8,32], index: 2, kind: input, shape index: {}]
  %s3 = inlined_call_operand.hbm [shape: f32[2,8,32], index: 3, kind: output, shape index: {0}]
  %s4 = inlined_call_operand.hbm [shape: f32[2,8,8], index: 4, kind: output, shape index: {1}]
  %5 = xla_tuple %s3, %s4
  %s6 = sld [smem:[#allocation0]]
  $region42: #{tpu_custom_call.1} parent=0
    _
  %s8 = ssub.s32 1, %s6
  %s9 = scalar_select 0, %s8, %s6
  $region1: #{tpu_custom_call.1} parent=0
    #allocation2 [shape = 'u8[8192]{0}', space=vmem, size = 0x2000, scoped, tag = 'input window, operand 0, single buffered']
    #allocation3 [shape = 's32[1]{0}', space=sflag, size = 0x4, scoped, tag = 'scoped memory for tpu_custom_call.1']
    #allocation4 [shape = 's32[1]{0}', space=sflag, size = 0x4, scoped, tag = 'scoped memory for tpu_custom_call.1']
    #allocation5 [shape = 'u8[8192]{0}', space=vmem, size = 0x2000, scoped, tag = 'input window, operand 1, single buffered']
    #allocation6 [shape = 's32[1]{0}', space=sflag, size = 0x4, scoped, tag = 'scoped memory for tpu_custom_call.1']
    #allocation7 [shape = 'u8[8192]{0}', space=vmem, size = 0x2000, scoped, tag = 'input window, operand 2, single buffered']
    #allocation8 [shape = 'u8[8192]{0}', space=vmem, size = 0x2000, scoped, tag = 'output window, operand 0, single buffered']
    #allocation9 [shape = 'u8[8192]{0}', space=vmem, size = 0x2000, scoped, tag = 'output window, operand 1, single buffered']
    #allocation10 [shape = 's32[1]{0}', space=sflag, size = 0x4, scoped, tag = 'scoped memory for tpu_custom_call.1']
    %10 = vsyncpa [#allocation3], 0
    %11 = vsyncpa [#allocation6], 0
    %12 = vsyncpa [#allocation4], 0
    %13 = vsyncpa [#allocation10], 0
    // Predicated region
    $region2: #{tpu_custom_call.1} parent=1 // pred_check
      _
    $region3: #{tpu_custom_call.1} parent=1 // pred_check_branch
      %15 = sbr.rel (0) target = $region5
    $region4: #{tpu_custom_call.1} parent=1 // pred_region
      %s17 = ssub.s32 256, 256
      %18 = vsyncadd [#allocation3], %s17
      %s19 = sshll.u32 [#allocation2], 4
      %s20 = int_to_ptr.vmem [resolvable:$true] %s19
      %25 = dma.hbm_to_vmem [thread:$0]  %s0, 256, %s20, [#allocation3], 128, 128, 8
    $region5: #{tpu_custom_call.1} parent=1 // pred_fallthru
      _
    // Predicated region
    $region6: #{tpu_custom_call.1} parent=1 // pred_check
      _
    $region7: #{tpu_custom_call.1} parent=1 // pred_check_branch
      %27 = sbr.rel (0) target = $region9
    $region8: #{tpu_custom_call.1} parent=1 // pred_region
      %s29 = ssub.s32 256, 256
      %30 = vsyncadd [#allocation6], %s29
      %s31 = sshll.u32 [#allocation5], 4
      %s32 = int_to_ptr.vmem [resolvable:$true] %s31
      %37 = dma.hbm_to_vmem [thread:$0]  %s1, 256, %s32, [#allocation6], 128, 128, 8
    $region9: #{tpu_custom_call.1} parent=1 // pred_fallthru
      _
    // Predicated region
    $region10: #{tpu_custom_call.1} parent=1 // pred_check
      _
    $region11: #{tpu_custom_call.1} parent=1 // pred_check_branch
      %39 = sbr.rel (0) target = $region13
    $region12: #{tpu_custom_call.1} parent=1 // pred_region
      %s41 = ssub.s32 256, 256
      %42 = vsyncadd [#allocation6], %s41
      %s43 = sshll.u32 [#allocation7], 4
      %s44 = int_to_ptr.vmem [resolvable:$true] %s43
      %49 = dma.hbm_to_vmem [thread:$0]  %s2, 256, %s44, [#allocation6], 128, 128, 8
    $region13: #{tpu_custom_call.1} parent=1 // pred_fallthru
      _
    // Predicated region
    $region14: #{tpu_custom_call.1} parent=1 // pred_check
      _
    $region15: #{tpu_custom_call.1} parent=1 // pred_check_branch
      %51 = sbr.rel (0) target = $region17
    $region16: #{tpu_custom_call.1} parent=1 // pred_region
      %52 = dma.done [#allocation3], 256
    $region17: #{tpu_custom_call.1} parent=1 // pred_fallthru
      _
    // Predicated region
    $region18: #{tpu_custom_call.1} parent=1 // pred_check
      _
    $region19: #{tpu_custom_call.1} parent=1 // pred_check_branch
      %54 = sbr.rel (0) target = $region21
    $region20: #{tpu_custom_call.1} parent=1 // pred_region
      %55 = dma.done [#allocation6], 256
    $region21: #{tpu_custom_call.1} parent=1 // pred_fallthru
      _
    // Predicated region
    $region22: #{tpu_custom_call.1} parent=1 // pred_check
      _
    $region23: #{tpu_custom_call.1} parent=1 // pred_check_branch
      %57 = sbr.rel (0) target = $region25
    $region24: #{tpu_custom_call.1} parent=1 // pred_region
      %58 = dma.done [#allocation6], 256
    $region25: #{tpu_custom_call.1} parent=1 // pred_fallthru
      _
    %v59 = vld [vmem:[#allocation2] sm:$0xff]
    %v60 = vld [vmem:[#allocation2 + $0x8] sm:$0xff]
    %v61 = vld [vmem:[#allocation5] sm:$0xff]
    %v62 = vld [vmem:[#allocation5 + $0x8] sm:$0xff]
    %vm63 = vcmask 261120
    %v65 = vsel %vm63, %v59, 0
    %v68 = vsel %vm63, %v61, 0
    %70 = vmatprep.subr.mxu0 0.0
    %71 = vmatpush1.xpose.msra.mxu0 %v68
    %72 = vmatprep.subr.mxu0 0.0
    %73 = vmatpush1.xpose.msra.mxu0 0.0
    %74 = vmatprep.subr.mxu0 0.0
    %75 = vmatpush1.xpose.msra.mxu0 0.0
    %76 = vmatprep.subr.mxu0 0.0
    %77 = vmatpush1.xpose.msra.mxu0 0.0
    %78 = vmatprep.subr.mxu0 0.0
    %79 = vmatpush1.xpose.msra.mxu0 0.0
    %80 = vmatprep.subr.mxu0 0.0
    %81 = vmatpush1.xpose.msra.mxu0 0.0
    %82 = vmatprep.subr.mxu0 0.0
    %83 = vmatpush1.xpose.msra.mxu0 0.0
    %84 = vmatprep.subr.mxu0 0.0
    %85 = vmatpush1.xpose.msra.mxu0 0.0
    %86 = vmatprep.subr.mxu0 0.0
    %87 = vmatpush1.xpose.msra.mxu0 0.0
    %88 = vmatprep.subr.mxu0 0.0
    %89 = vmatpush1.xpose.msra.mxu0 0.0
    %90 = vmatprep.subr.mxu0 0.0
    %91 = vmatpush1.xpose.msra.mxu0 0.0
    %92 = vmatprep.subr.mxu0 0.0
    %93 = vmatpush1.xpose.msra.mxu0 0.0
    %94 = vmatprep.subr.mxu0 0.0
    %95 = vmatpush1.xpose.msra.mxu0 0.0
    %96 = vmatprep.subr.mxu0 0.0
    %97 = vmatpush1.xpose.msra.mxu0 0.0
    %98 = vmatprep.subr.mxu0 0.0
    %99 = vmatpush1.xpose.msra.mxu0 0.0
    %100 = vmatprep.subr.mxu0 0.0
    %101 = vmatpush1.xpose.msra.mxu0 0.0
    %102 = vmatprep.subr.mxu0 0.0
    %103 = vmatpush1.xpose.msra.mxu0 0.0
    %104 = vmatprep.subr.mxu0 0.0
    %105 = vmatpush1.xpose.msra.mxu0 0.0
    %106 = vmatprep.subr.mxu0 0.0
    %107 = vmatpush1.xpose.msra.mxu0 0.0
    %108 = vmatprep.subr.mxu0 0.0
    %109 = vmatpush1.xpose.msra.mxu0 0.0
    %110 = vmatprep.subr.mxu0 0.0
    %111 = vmatpush1.xpose.msra.mxu0 0.0
    %112 = vmatprep.subr.mxu0 0.0
    %113 = vmatpush1.xpose.msra.mxu0 0.0
    %114 = vmatprep.subr.mxu0 0.0
    %115 = vmatpush1.xpose.msra.mxu0 0.0
    %116 = vmatprep.subr.mxu0 0.0
    %117 = vmatpush1.xpose.msra.mxu0 0.0
    %118 = vmatprep.subr.mxu0 0.0
    %119 = vmatpush1.xpose.msra.mxu0 0.0
    %120 = vmatprep.subr.mxu0 0.0
    %121 = vmatpush1.xpose.msra.mxu0 0.0
    %122 = vmatprep.subr.mxu0 0.0
    %123 = vmatpush1.xpose.msra.mxu0 0.0
    %124 = vmatprep.subr.mxu0 0.0
    %125 = vmatpush1.xpose.msra.mxu0 0.0
    %126 = vmatprep.subr.mxu0 0.0
    %127 = vmatpush1.xpose.msra.mxu0 0.0
    %128 = vmatprep.subr.mxu0 0.0
    %129 = vmatpush1.xpose.msra.mxu0 0.0
    %130 = vmatprep.subr.mxu0 0.0
    %131 = vmatpush1.xpose.msra.mxu0 0.0
    %132 = vmatprep.subr.mxu0 0.0
    %133 = vmatpush1.xpose.msra.mxu0 0.0
    %134 = vmatprep.mubr.f32.mxu0 0.0
    %135 = vmatmul.mubr.f32.gmra.mrb[0].mxu0 %v65
    %v136 = vpop.f32.mrb[0].mxu0
    %v137 = vadd.f32 0.0, %v136
    %v138 = vpop.f32.mrb[0].mxu0
    %139 = vdwg.mxu0
    %v141 = vsel %vm63, %v60, 0
    %v144 = vsel %vm63, %v62, 0
    %146 = vmatprep.subr.mxu0 0.0
    %147 = vmatpush1.xpose.msra.mxu0 %v144
    %148 = vmatprep.subr.mxu0 0.0
    %149 = vmatpush1.xpose.msra.mxu0 0.0
    %150 = vmatprep.subr.mxu0 0.0
    %151 = vmatpush1.xpose.msra.mxu0 0.0
    %152 = vmatprep.subr.mxu0 0.0
    %153 = vmatpush1.xpose.msra.mxu0 0.0
    %154 = vmatprep.subr.mxu0 0.0
    %155 = vmatpush1.xpose.msra.mxu0 0.0
    %156 = vmatprep.subr.mxu0 0.0
    %157 = vmatpush1.xpose.msra.mxu0 0.0
    %158 = vmatprep.subr.mxu0 0.0
    %159 = vmatpush1.xpose.msra.mxu0 0.0
    %160 = vmatprep.subr.mxu0 0.0
    %161 = vmatpush1.xpose.msra.mxu0 0.0
    %162 = vmatprep.subr.mxu0 0.0
    %163 = vmatpush1.xpose.msra.mxu0 0.0
    %164 = vmatprep.subr.mxu0 0.0
    %165 = vmatpush1.xpose.msra.mxu0 0.0
    %166 = vmatprep.subr.mxu0 0.0
    %167 = vmatpush1.xpose.msra.mxu0 0.0
    %168 = vmatprep.subr.mxu0 0.0
    %169 = vmatpush1.xpose.msra.mxu0 0.0
    %170 = vmatprep.subr.mxu0 0.0
    %171 = vmatpush1.xpose.msra.mxu0 0.0
    %172 = vmatprep.subr.mxu0 0.0
    %173 = vmatpush1.xpose.msra.mxu0 0.0
    %174 = vmatprep.subr.mxu0 0.0
    %175 = vmatpush1.xpose.msra.mxu0 0.0
    %176 = vmatprep.subr.mxu0 0.0
    %177 = vmatpush1.xpose.msra.mxu0 0.0
    %178 = vmatprep.subr.mxu0 0.0
    %179 = vmatpush1.xpose.msra.mxu0 0.0
    %180 = vmatprep.subr.mxu0 0.0
    %181 = vmatpush1.xpose.msra.mxu0 0.0
    %182 = vmatprep.subr.mxu0 0.0
    %183 = vmatpush1.xpose.msra.mxu0 0.0
    %184 = vmatprep.subr.mxu0 0.0
    %185 = vmatpush1.xpose.msra.mxu0 0.0
    %186 = vmatprep.subr.mxu0 0.0
    %187 = vmatpush1.xpose.msra.mxu0 0.0
    %188 = vmatprep.subr.mxu0 0.0
    %189 = vmatpush1.xpose.msra.mxu0 0.0
    %190 = vmatprep.subr.mxu0 0.0
    %191 = vmatpush1.xpose.msra.mxu0 0.0
    %192 = vmatprep.subr.mxu0 0.0
    %193 = vmatpush1.xpose.msra.mxu0 0.0
    %194 = vmatprep.subr.mxu0 0.0
    %195 = vmatpush1.xpose.msra.mxu0 0.0
    %196 = vmatprep.subr.mxu0 0.0
    %197 = vmatpush1.xpose.msra.mxu0 0.0
    %198 = vmatprep.subr.mxu0 0.0
    %199 = vmatpush1.xpose.msra.mxu0 0.0
    %200 = vmatprep.subr.mxu0 0.0
    %201 = vmatpush1.xpose.msra.mxu0 0.0
    %202 = vmatprep.subr.mxu0 0.0
    %203 = vmatpush1.xpose.msra.mxu0 0.0
    %204 = vmatprep.subr.mxu0 0.0
    %205 = vmatpush1.xpose.msra.mxu0 0.0
    %206 = vmatprep.subr.mxu0 0.0
    %207 = vmatpush1.xpose.msra.mxu0 0.0
    %208 = vmatprep.subr.mxu0 0.0
    %209 = vmatpush1.xpose.msra.mxu0 0.0
    %210 = vmatprep.mubr.f32.mxu0 0.0
    %211 = vmatmul.mubr.f32.gmra.mrb[0].mxu0 %v141
    %v212 = vpop.f32.mrb[0].mxu0
    %v213 = vadd.f32 0.0, %v212
    %v214 = vpop.f32.mrb[0].mxu0
    %215 = vdwg.mxu0
    %v216 = vmul.f32 %v137, 0.17677669
    %v217 = vmul.f32 %v213, 0.17677669
    %vm218 = vcmask 64512
    %v219 = vsel %vm218, %v216, -inf
    %220 = vmax.xlane.f32.xlu0 %v219
    %v221 = vpop.xlane.xlu0 %220
    %v222 = vsel %vm218, %v217, -inf
    %223 = vmax.xlane.f32.xlu0 %v222
    %v224 = vpop.xlane.xlu0 %223
    %v225 = vsub.f32 %v216, %v221
    %v226 = vsub.f32 %v217, %v224
    %v227 = vmul.f32 %v225, 1.442695
    %v228 = vpow.pop %v227
    %v229 = vmul.f32 %v226, 1.442695
    %v230 = vpow.pop %v229
    %v231 = vsel %vm218, %v228, 0.0
    %232 = vadd.xlane.f32.xlu0 %v231
    %v233 = vpop.xlane.xlu0 %232
    %v234 = vsel %vm218, %v230, 0.0
    %235 = vadd.xlane.f32.xlu0 %v234
    %v236 = vpop.xlane.xlu0 %235
    %v237 = vsel %vm218, %v228, -inf
    %238 = vmax.xlane.f32.xlu0 %v237
    %v239 = vpop.xlane.xlu0 %238
    %v240 = vsel %vm218, %v230, -inf
    %241 = vmax.xlane.f32.xlu0 %v240
    %v242 = vpop.xlane.xlu0 %241
    %vm243 = vcmp.ge.f32.partialorder %v228, %v239
    %vm244 = vcmp.ge.f32.partialorder %v230, %v242
    %v245 = vsel %vm243, -1.0, %v228
    %v246 = vsel %vm244, -1.0, %v230
    %v247 = vsel %vm218, %v245, -inf
    %248 = vmax.xlane.f32.xlu0 %v247
    %v249 = vpop.xlane.xlu0 %248
    %v250 = vsel %vm218, %v246, -inf
    %251 = vmax.xlane.f32.xlu0 %v250
    %v252 = vpop.xlane.xlu0 %251
    %vm253 = vcmp.ge.f32.partialorder %v245, %v249
    %vm254 = vcmp.ge.f32.partialorder %v246, %v252
    %v255 = vsel %vm253, -1.0, %v245
    %v256 = vsel %vm254, -1.0, %v246
    %v257 = vsel %vm218, %v255, -inf
    %258 = vmax.xlane.f32.xlu0 %v257
    %v259 = vpop.xlane.xlu0 %258
    %v260 = vsel %vm218, %v256, -inf
    %261 = vmax.xlane.f32.xlu0 %v260
    %v262 = vpop.xlane.xlu0 %261
    %vm263 = vcmp.ge.f32.partialorder %v255, %v259
    %vm264 = vcmp.ge.f32.partialorder %v256, %v262
    %v265 = vsel %vm263, -1.0, %v255
    %v266 = vsel %vm264, -1.0, %v256
    %v267 = vsel %vm218, %v265, -inf
    %268 = vmax.xlane.f32.xlu0 %v267
    %v269 = vpop.xlane.xlu0 %268
    %v270 = vsel %vm218, %v266, -inf
    %271 = vmax.xlane.f32.xlu0 %v270
    %v272 = vpop.xlane.xlu0 %271
    %v273 = vmul.f32 %v233, 1e-07
    %v274 = vmul.f32 %v236, 1e-07
    %v275 = vadd.f32 %v269, %v273
    %v276 = vadd.f32 %v272, %v274
    %v277 = vsub.f32 %v228, %v275
    %v278 = vsub.f32 %v230, %v276
    %v279 = vmax.f32 %v277, 0.0
    %v280 = vmax.f32 %v278, 0.0
    %v281 = vsel %vm218, %v279, 0.0
    %282 = vadd.xlane.f32.xlu0 %v281
    %v283 = vpop.xlane.xlu0 %282
    %v284 = vsel %vm218, %v280, 0.0
    %285 = vadd.xlane.f32.xlu0 %v284
    %v286 = vpop.xlane.xlu0 %285
    %v287 = vadd.f32 %v283, %v273
    %v288 = vadd.f32 %v286, %v274
    %v289 = vrcp.pop %v287
    %v290 = vmul.f32 1.0, %v289
    %v291 = vrcp.pop %v288
    %v292 = vmul.f32 1.0, %v291
    %v293 = vmul.f32 %v279, %v290
    %v294 = vmul.f32 %v280, %v292
    %v295 = vld [vmem:[#allocation7] sm:$0xff]
    %v296 = vld [vmem:[#allocation7 + $0x8] sm:$0xff]
    %v298 = vsel %vm218, %v293, 0
    %300 = vmatprep.subr.mxu0 0.0
    %301 = vmatpush1.msra.mxu0 %v295
    %302 = vmatprep.subr.mxu0 0.0
    %303 = vmatpush1.msra.mxu0 0.0
    %304 = vmatprep.subr.mxu0 0.0
    %305 = vmatpush1.msra.mxu0 0.0
    %306 = vmatprep.subr.mxu0 0.0
    %307 = vmatpush1.msra.mxu0 0.0
    %308 = vmatprep.subr.mxu0 0.0
    %309 = vmatpush1.msra.mxu0 0.0
    %310 = vmatprep.subr.mxu0 0.0
    %311 = vmatpush1.msra.mxu0 0.0
    %312 = vmatprep.subr.mxu0 0.0
    %313 = vmatpush1.msra.mxu0 0.0
    %314 = vmatprep.subr.mxu0 0.0
    %315 = vmatpush1.msra.mxu0 0.0
    %316 = vmatprep.subr.mxu0 0.0
    %317 = vmatpush1.msra.mxu0 0.0
    %318 = vmatprep.subr.mxu0 0.0
    %319 = vmatpush1.msra.mxu0 0.0
    %320 = vmatprep.subr.mxu0 0.0
    %321 = vmatpush1.msra.mxu0 0.0
    %322 = vmatprep.subr.mxu0 0.0
    %323 = vmatpush1.msra.mxu0 0.0
    %324 = vmatprep.subr.mxu0 0.0
    %325 = vmatpush1.msra.mxu0 0.0
    %326 = vmatprep.subr.mxu0 0.0
    %327 = vmatpush1.msra.mxu0 0.0
    %328 = vmatprep.subr.mxu0 0.0
    %329 = vmatpush1.msra.mxu0 0.0
    %330 = vmatprep.subr.mxu0 0.0
    %331 = vmatpush1.msra.mxu0 0.0
    %332 = vmatprep.subr.mxu0 0.0
    %333 = vmatpush1.msra.mxu0 0.0
    %334 = vmatprep.subr.mxu0 0.0
    %335 = vmatpush1.msra.mxu0 0.0
    %336 = vmatprep.subr.mxu0 0.0
    %337 = vmatpush1.msra.mxu0 0.0
    %338 = vmatprep.subr.mxu0 0.0
    %339 = vmatpush1.msra.mxu0 0.0
    %340 = vmatprep.subr.mxu0 0.0
    %341 = vmatpush1.msra.mxu0 0.0
    %342 = vmatprep.subr.mxu0 0.0
    %343 = vmatpush1.msra.mxu0 0.0
    %344 = vmatprep.subr.mxu0 0.0
    %345 = vmatpush1.msra.mxu0 0.0
    %346 = vmatprep.subr.mxu0 0.0
    %347 = vmatpush1.msra.mxu0 0.0
    %348 = vmatprep.subr.mxu0 0.0
    %349 = vmatpush1.msra.mxu0 0.0
    %350 = vmatprep.subr.mxu0 0.0
    %351 = vmatpush1.msra.mxu0 0.0
    %352 = vmatprep.subr.mxu0 0.0
    %353 = vmatpush1.msra.mxu0 0.0
    %354 = vmatprep.subr.mxu0 0.0
    %355 = vmatpush1.msra.mxu0 0.0
    %356 = vmatprep.subr.mxu0 0.0
    %357 = vmatpush1.msra.mxu0 0.0
    %358 = vmatprep.subr.mxu0 0.0
    %359 = vmatpush1.msra.mxu0 0.0
    %360 = vmatprep.subr.mxu0 0.0
    %361 = vmatpush1.msra.mxu0 0.0
    %362 = vmatprep.subr.mxu0 0.0
    %363 = vmatpush1.msra.mxu0 0.0
    %364 = vmatprep.mubr.f32.mxu0 0.0
    %365 = vmatmul.mubr.f32.gmra.mrb[0].mxu0 %v298
    %v366 = vpop.f32.mrb[0].mxu0
    %v367 = vadd.f32 0.0, %v366
    %v368 = vpop.f32.mrb[0].mxu0
    %369 = vdwg.mxu0
    %v371 = vsel %vm218, %v294, 0
    %373 = vmatprep.subr.mxu0 0.0
    %374 = vmatpush1.msra.mxu0 %v296
    %375 = vmatprep.subr.mxu0 0.0
    %376 = vmatpush1.msra.mxu0 0.0
    %377 = vmatprep.subr.mxu0 0.0
    %378 = vmatpush1.msra.mxu0 0.0
    %379 = vmatprep.subr.mxu0 0.0
    %380 = vmatpush1.msra.mxu0 0.0
    %381 = vmatprep.subr.mxu0 0.0
    %382 = vmatpush1.msra.mxu0 0.0
    %383 = vmatprep.subr.mxu0 0.0
    %384 = vmatpush1.msra.mxu0 0.0
    %385 = vmatprep.subr.mxu0 0.0
    %386 = vmatpush1.msra.mxu0 0.0
    %387 = vmatprep.subr.mxu0 0.0
    %388 = vmatpush1.msra.mxu0 0.0
    %389 = vmatprep.subr.mxu0 0.0
    %390 = vmatpush1.msra.mxu0 0.0
    %391 = vmatprep.subr.mxu0 0.0
    %392 = vmatpush1.msra.mxu0 0.0
    %393 = vmatprep.subr.mxu0 0.0
    %394 = vmatpush1.msra.mxu0 0.0
    %395 = vmatprep.subr.mxu0 0.0
    %396 = vmatpush1.msra.mxu0 0.0
    %397 = vmatprep.subr.mxu0 0.0
    %398 = vmatpush1.msra.mxu0 0.0
    %399 = vmatprep.subr.mxu0 0.0
    %400 = vmatpush1.msra.mxu0 0.0
    %401 = vmatprep.subr.mxu0 0.0
    %402 = vmatpush1.msra.mxu0 0.0
    %403 = vmatprep.subr.mxu0 0.0
    %404 = vmatpush1.msra.mxu0 0.0
    %405 = vmatprep.subr.mxu0 0.0
    %406 = vmatpush1.msra.mxu0 0.0
    %407 = vmatprep.subr.mxu0 0.0
    %408 = vmatpush1.msra.mxu0 0.0
    %409 = vmatprep.subr.mxu0 0.0
    %410 = vmatpush1.msra.mxu0 0.0
    %411 = vmatprep.subr.mxu0 0.0
    %412 = vmatpush1.msra.mxu0 0.0
    %413 = vmatprep.subr.mxu0 0.0
    %414 = vmatpush1.msra.mxu0 0.0
    %415 = vmatprep.subr.mxu0 0.0
    %416 = vmatpush1.msra.mxu0 0.0
    %417 = vmatprep.subr.mxu0 0.0
    %418 = vmatpush1.msra.mxu0 0.0
    %419 = vmatprep.subr.mxu0 0.0
    %420 = vmatpush1.msra.mxu0 0.0
    %421 = vmatprep.subr.mxu0 0.0
    %422 = vmatpush1.msra.mxu0 0.0
    %423 = vmatprep.subr.mxu0 0.0
    %424 = vmatpush1.msra.mxu0 0.0
    %425 = vmatprep.subr.mxu0 0.0
    %426 = vmatpush1.msra.mxu0 0.0
    %427 = vmatprep.subr.mxu0 0.0
    %428 = vmatpush1.msra.mxu0 0.0
    %429 = vmatprep.subr.mxu0 0.0
    %430 = vmatpush1.msra.mxu0 0.0
    %431 = vmatprep.subr.mxu0 0.0
    %432 = vmatpush1.msra.mxu0 0.0
    %433 = vmatprep.subr.mxu0 0.0
    %434 = vmatpush1.msra.mxu0 0.0
    %435 = vmatprep.subr.mxu0 0.0
    %436 = vmatpush1.msra.mxu0 0.0
    %437 = vmatprep.mubr.f32.mxu0 0.0
    %438 = vmatmul.mubr.f32.gmra.mrb[0].mxu0 %v371
    %v439 = vpop.f32.mrb[0].mxu0
    %v440 = vadd.f32 0.0, %v439
    %v441 = vpop.f32.mrb[0].mxu0
    %442 = vdwg.mxu0
    %443 = vst.msk [vmem:[#allocation8] sm:$0xff] %vm63, %v367
    %444 = vst.msk [vmem:[#allocation8 + $0x8] sm:$0xff] %vm63, %v440
    %445 = vst.msk [vmem:[#allocation9] sm:$0xff] %vm218, %v293
    %446 = vst.msk [vmem:[#allocation9 + $0x8] sm:$0xff] %vm218, %v294
    // Predicated region
    $region26: #{tpu_custom_call.1} parent=1 // pred_check
      _
    $region27: #{tpu_custom_call.1} parent=1 // pred_check_branch
      %448 = sbr.rel (0) target = $region29
    $region28: #{tpu_custom_call.1} parent=1 // pred_region
      %s450 = ssub.s32 256, 256
      %451 = vsyncadd [#allocation4], %s450
      %s452 = sshll.u32 [#allocation8], 4
      %s453 = int_to_ptr.vmem [resolvable:$true] %s452
      %458 = dma.vmem_to_hbm [thread:$0]  %s453, 256, %s3, [#allocation4], 128, 128, 8
    $region29: #{tpu_custom_call.1} parent=1 // pred_fallthru
      _
    // Predicated region
    $region30: #{tpu_custom_call.1} parent=1 // pred_check
      _
    $region31: #{tpu_custom_call.1} parent=1 // pred_check_branch
      %460 = sbr.rel (0) target = $region33
    $region32: #{tpu_custom_call.1} parent=1 // pred_region
      %s462 = ssub.s32 256, 256
      %463 = vsyncadd [#allocation10], %s462
      %s464 = sshll.u32 [#allocation9], 4
      %s465 = int_to_ptr.vmem [resolvable:$true] %s464
      %470 = dma.vmem_to_hbm [thread:$0]  %s465, 256, %s4, [#allocation10], 128, 128, 8
    $region33: #{tpu_custom_call.1} parent=1 // pred_fallthru
      _
    // Predicated region
    $region34: #{tpu_custom_call.1} parent=1 // pred_check
      _
    $region35: #{tpu_custom_call.1} parent=1 // pred_check_branch
      %472 = sbr.rel (0) target = $region37
    $region36: #{tpu_custom_call.1} parent=1 // pred_region
      %473 = dma.done [#allocation4], 256
    $region37: #{tpu_custom_call.1} parent=1 // pred_fallthru
      _
    // Predicated region
    $region38: #{tpu_custom_call.1} parent=1 // pred_check
      _
    $region39: #{tpu_custom_call.1} parent=1 // pred_check_branch
      %475 = sbr.rel (0) target = $region41
    $region40: #{tpu_custom_call.1} parent=1 // pred_region
      %476 = dma.done [#allocation10], 256
    $region41: #{tpu_custom_call.1} parent=1 // pred_fallthru
      _
    %477 = vsyncpa [#allocation3], 1
    %478 = vsyncpa [#allocation6], 1
    %479 = vsyncpa [#allocation4], 1
    %480 = vsyncpa [#allocation10], 1

</llo_original>
